<compile_context>
chip_gen: v7x
topology: tpu7x:2x2x1
jax: 0.10.0
libtpu: 0.0.40
codegen_flags: <defaults>
</compile_context>

<pallas_src>
import jax
import jax.numpy as jnp
from jax import lax
from jax.experimental import pallas as pl
from jax.experimental.pallas import tpu as pltpu


def _round_up(x, m):
    return ((x + m - 1) // m) * m


# --------------------------- fused model kernel -------------------------------
def _make_fused_kernel(num_layers, seq_len, batch_c, hidden, mxu_dtype):
    """kernel(x, [w_ih_t, w_hh_t, bias]*L, w_reg, b_reg, out, xw_sc, h_sc)."""
    T, Bc, H = seq_len, batch_c, hidden
    NG = 4 * H
    unroll = T if T <= 8 else 8

    def kernel(x_ref, *rest):
        w_refs = rest[:3 * num_layers + 2]
        out_ref = rest[3 * num_layers + 2]
        xw_sc = rest[3 * num_layers + 3]      # (T*Bc, 4H) f32: hoisted projection
        h_sc = rest[3 * num_layers + 4]       # (T*Bc, H)  f32: per-layer h slab

        # Hoisted gate-lane masks.  Single-tanh activation:
        #   sigmoid(x) = 0.5 * tanh(0.5 x) + 0.5   on i/f/o lanes,
        #   tanh(x)                                 on g lanes,
        # so only ONE transcendental pass over the (Bc, 4H) tile per step.
        lane = lax.broadcasted_iota(jnp.int32, (Bc, NG), 1)
        is_g = jnp.logical_and(lane >= 2 * H, lane < 3 * H)
        gate_scale = jnp.where(is_g, 1.0, 0.5).astype(jnp.float32)
        gate_shift = jnp.where(is_g, 0.0, 0.5).astype(jnp.float32)

        for layer in range(num_layers):
            w_ih = w_refs[3 * layer][...]      # (in_dim, 4H) mxu_dtype
            w_hh = w_refs[3 * layer + 1][...]  # (H, 4H)      mxu_dtype
            bias = w_refs[3 * layer + 2][...]  # (1, 4H)      f32

            # Hoisted input projection over all T*Bc rows (one big MXU pass),
            # written to VMEM scratch so the recurrence reads (Bc, 4H) slices.
            lhs = x_ref[0] if layer == 0 else h_sc[...].astype(mxu_dtype)
            xw_sc[...] = jnp.dot(lhs, w_ih,
                                 preferred_element_type=jnp.float32) + bias

            def step(t, carry, w_hh=w_hh):
                h, c = carry                                    # (Bc, H) f32
                row = pl.multiple_of(t * Bc, Bc)
                gates = xw_sc[pl.ds(row, Bc), :] + jnp.dot(
                    h.astype(mxu_dtype), w_hh,
                    preferred_element_type=jnp.float32)         # (Bc, 4H)
                tnh = jnp.tanh(gates * gate_scale)              # single EUP pass
                act = tnh * gate_scale + gate_shift
                # TODO(synk): for H < 128 these are sub-lane-tile slices; a
                # roll-based full-lane-width c/h update would keep the VPU full.
                i_g = act[:, 0 * H:1 * H]
                f_g = act[:, 1 * H:2 * H]
                g_g = act[:, 2 * H:3 * H]
                o_g = act[:, 3 * H:4 * H]
                c = f_g * c + i_g * g_g
                h = o_g * jnp.tanh(c)
                h_sc[pl.ds(row, Bc), :] = h                     # bounded live range
                return h, c

            h0 = jnp.zeros((Bc, H), jnp.float32)
            c0 = jnp.zeros((Bc, H), jnp.float32)
            lax.fori_loop(0, T, step, (h0, c0), unroll=unroll)

        # Fused classifier epilogue: lane-padded (128-wide) dense store.
        w_reg = w_refs[3 * num_layers][...]       # (H, padC) mxu_dtype
        b_reg = w_refs[3 * num_layers + 1][...]   # (1, padC) f32
        logits = jnp.dot(h_sc[...].astype(mxu_dtype), w_reg,
                         preferred_element_type=jnp.float32) + b_reg
        out_ref[0] = logits.astype(out_ref.dtype)

    return kernel


# ------------------------------ model wrapper ---------------------------------
def lstm_model_forward(x, params, *, num_cores=1, mxu_dtype=jnp.bfloat16):
    """x: (T, B, D) time-major.  Returns (T*B, num_classes) float32."""
    T, B, D = x.shape
    H = params["lstm"][0][1].shape[1]
    L = len(params["lstm"])
    w_reg, b_reg = params["reg"]
    C = w_reg.shape[0]
    pad_c = _round_up(C, 128)                       # lane-dense output width

    # Per-core batch chunk, padded to the f32 sublane minimum (8).
    Bc = max(8, _round_up(-(-B // num_cores), 8))
    Bp = Bc * num_cores

    # Pad batch, split core-major, flatten time-major per core: (cores, T*Bc, D).
    x_pad = jnp.zeros((T, Bp, D), jnp.float32).at[:, :B, :].set(x.astype(jnp.float32))
    x_core = (x_pad.reshape(T, num_cores, Bc, D)
                   .transpose(1, 0, 2, 3)
                   .reshape(num_cores, T * Bc, D)
                   .astype(mxu_dtype))

    def full_spec(shape):
        return pl.BlockSpec(shape, lambda c, _s=shape: (0,) * len(_s))

    args = [x_core]
    in_specs = [pl.BlockSpec((1, T * Bc, D), lambda c: (c, 0, 0))]

    for (w_ih, w_hh, b_ih, b_hh) in params["lstm"]:
        w_ih_t = w_ih.T.astype(mxu_dtype)                     # (in_dim, 4H)
        w_hh_t = w_hh.T.astype(mxu_dtype)                     # (H, 4H)
        bias = (b_ih + b_hh)[None, :].astype(jnp.float32)     # (1, 4H) f32
        args += [w_ih_t, w_hh_t, bias]
        in_specs += [full_spec(w_ih_t.shape), full_spec(w_hh_t.shape),
                     full_spec(bias.shape)]

    w_pad = jnp.zeros((H, pad_c), mxu_dtype).at[:, :C].set(w_reg.T.astype(mxu_dtype))
    b_pad = jnp.zeros((1, pad_c), jnp.float32).at[:, :C].set(b_reg.astype(jnp.float32))
    args += [w_pad, b_pad]
    in_specs += [full_spec(w_pad.shape), full_spec(b_pad.shape)]

    # Explicit VMEM budget (all weights + one per-core x/out block + scratch).
    # TODO(synk): for large H/L/T*B that exceed this budget, stream per-layer
    # weights from HBM (memory_space=pl.ANY + make_async_copy) and chunk the
    # hoisted projection over T instead of keeping everything VMEM-resident.
    blk_in = int(args[0].size // num_cores) * args[0].dtype.itemsize + sum(
        int(a.size) * a.dtype.itemsize for a in args[1:])
    blk_out = T * Bc * pad_c * 4
    scratch_bytes = (T * Bc * 4 * H + T * Bc * H) * 4
    need = 2 * (blk_in + blk_out) + scratch_bytes
    vmem_limit = int(min(48 * 2**20, max(8 * 2**20, 2 * need)))

    kernel = _make_fused_kernel(L, T, Bc, H, mxu_dtype)
    out = pl.pallas_call(
        kernel,
        grid=(num_cores,),
        out_shape=jax.ShapeDtypeStruct((num_cores, T * Bc, pad_c), jnp.float32),
        in_specs=in_specs,
        out_specs=pl.BlockSpec((1, T * Bc, pad_c), lambda c: (c, 0, 0)),
        scratch_shapes=[pltpu.VMEM((T * Bc, 4 * H), jnp.float32),
                        pltpu.VMEM((T * Bc, H), jnp.float32)],
        compiler_params=pltpu.CompilerParams(
            dimension_semantics=("parallel",),       # 2-TC split on v7x
            vmem_limit_bytes=vmem_limit),
    )(*args)

    # Layout plumbing back to (T*B, C).
    out = (out.reshape(num_cores, T, Bc, pad_c)
              .transpose(1, 0, 2, 3)
              .reshape(T, Bp, pad_c))
    return out[:, :B, :C].reshape(T * B, C)


# ---------------------------- pure-JAX reference -------------------------------
def lstm_model_ref(x, params):
    hp = jax.lax.Precision.HIGHEST
    h = x
    for (w_ih, w_hh, b_ih, b_hh) in params["lstm"]:
        H = w_hh.shape[1]
        B = h.shape[1]

        def step(carry, x_t, w_ih=w_ih, w_hh=w_hh, b_ih=b_ih, b_hh=b_hh, H=H):
            h_prev, c_prev = carry
            gates = (jnp.dot(x_t, w_ih.T, precision=hp)
                     + jnp.dot(h_prev, w_hh.T, precision=hp) + b_ih + b_hh)
            i = jax.nn.sigmoid(gates[:, 0 * H:1 * H])
            f = jax.nn.sigmoid(gates[:, 1 * H:2 * H])
            g = jnp.tanh(gates[:, 2 * H:3 * H])
            o = jax.nn.sigmoid(gates[:, 3 * H:4 * H])
            c = f * c_prev + i * g
            hh = o * jnp.tanh(c)
            return (hh, c), hh

        init = (jnp.zeros((B, H), jnp.float32), jnp.zeros((B, H), jnp.float32))
        _, h = jax.lax.scan(step, init, h)
    hidden = h.shape[-1]
    w, b = params["reg"]
    return jnp.dot(h.reshape(-1, hidden), w.T, precision=hp) + b


# ------------------------------ param init -------------------------------------
def init_params(key, configs):
    D, H, L, C = (configs["fusion_dim"], configs["hidden_dim"],
                  configs["layers"], configs["num_classes"])
    bound = 1.0 / jnp.sqrt(H)  # PyTorch nn.LSTM / nn.Linear-style uniform init
    params = {"lstm": []}
    for layer in range(L):
        in_dim = D if layer == 0 else H
        key, k1, k2, k3, k4 = jax.random.split(key, 5)
        params["lstm"].append((
            jax.random.uniform(k1, (4 * H, in_dim), jnp.float32, -bound, bound),
            jax.random.uniform(k2, (4 * H, H), jnp.float32, -bound, bound),
            jax.random.uniform(k3, (4 * H,), jnp.float32, -bound, bound),
            jax.random.uniform(k4, (4 * H,), jnp.float32, -bound, bound),
        ))
    key, k1, k2 = jax.random.split(key, 3)
    params["reg"] = (
        jax.random.uniform(k1, (C, H), jnp.float32, -bound, bound),
        jax.random.uniform(k2, (C,), jnp.float32, -bound, bound),
    )
    return params


# ---------------------------------- main ----------------------------------------
if __name__ == "__main__":
    configs = {"fusion_dim": 32, "hidden_dim": 32, "layers": 2, "num_classes": 8}
    seq_len, batch = 8, 2

    key = jax.random.PRNGKey(0)
    key, kx = jax.random.split(key)
    x = jax.random.normal(kx, (seq_len, batch, configs["fusion_dim"]), jnp.float32)
    params = init_params(key, configs)

    ref = lstm_model_ref(x, params)

    # (1) f32 MXU feed, single core grid: structural-correctness check (tight).
    out_f32 = jax.block_until_ready(
        lstm_model_forward(x, params, num_cores=1, mxu_dtype=jnp.float32))
    assert out_f32.shape == (seq_len * batch, configs["num_classes"])
    err_f32 = float(jnp.max(jnp.abs(out_f32 - ref)))
    assert err_f32 < 2e-3, f"f32 max abs err {err_f32}"

    # (2) perf variant: bf16 MXU feed + 2-way core-parallel batch grid (v7x path).
    out_bf16 = jax.block_until_ready(
        lstm_model_forward(x, params, num_cores=2, mxu_dtype=jnp.bfloat16))
    assert out_bf16.shape == (seq_len * batch, configs["num_classes"])
    err_bf16 = float(jnp.max(jnp.abs(out_bf16 - ref)))
    assert err_bf16 < 5e-2, f"bf16 max abs err {err_bf16}"

    print("KERNEL_OK")
</pallas_src>

<mosaic_0001>
module attributes {stable_mosaic.version = 11 : i64} {
  func.func @kernel(%arg0: i32, %arg1: memref<1x64x32xf32, #tpu.memory_space<vmem>>, %arg2: memref<32x128xf32, #tpu.memory_space<vmem>>, %arg3: memref<32x128xf32, #tpu.memory_space<vmem>>, %arg4: memref<1x128xf32, #tpu.memory_space<vmem>>, %arg5: memref<32x128xf32, #tpu.memory_space<vmem>>, %arg6: memref<32x128xf32, #tpu.memory_space<vmem>>, %arg7: memref<1x128xf32, #tpu.memory_space<vmem>>, %arg8: memref<32x128xf32, #tpu.memory_space<vmem>>, %arg9: memref<1x128xf32, #tpu.memory_space<vmem>>, %arg10: memref<1x64x128xf32, #tpu.memory_space<vmem>>, %arg11: memref<64x128xf32, #tpu.memory_space<vmem>>, %arg12: memref<64x32xf32, #tpu.memory_space<vmem>>) attributes {dimension_semantics = [#tpu.dimension_semantics<parallel>], iteration_bounds = array<i64: 1>, scalar_prefetch = 0 : i64, scratch_operands = 2 : i64, tpu.core_type = #tpu.core_type<tc>, window_params = [{transform_indices = @transform_0, window_bounds = array<i64: 1, 64, 32>}, {pipeline_mode = #tpu.pipeline_mode<synchronous>, transform_indices = @transform_1, window_bounds = array<i64: 32, 128>}, {pipeline_mode = #tpu.pipeline_mode<synchronous>, transform_indices = @transform_2, window_bounds = array<i64: 32, 128>}, {pipeline_mode = #tpu.pipeline_mode<synchronous>, transform_indices = @transform_3, window_bounds = array<i64: 1, 128>}, {pipeline_mode = #tpu.pipeline_mode<synchronous>, transform_indices = @transform_4, window_bounds = array<i64: 32, 128>}, {pipeline_mode = #tpu.pipeline_mode<synchronous>, transform_indices = @transform_5, window_bounds = array<i64: 32, 128>}, {pipeline_mode = #tpu.pipeline_mode<synchronous>, transform_indices = @transform_6, window_bounds = array<i64: 1, 128>}, {pipeline_mode = #tpu.pipeline_mode<synchronous>, transform_indices = @transform_7, window_bounds = array<i64: 32, 128>}, {pipeline_mode = #tpu.pipeline_mode<synchronous>, transform_indices = @transform_8, window_bounds = array<i64: 1, 128>}, {transform_indices = @transform_9, window_bounds = array<i64: 1, 64, 128>}]} {
    %0 = tpu.iota {dimensions = array<i32: 1>} : vector<8x128xi32>
    %c64_i32 = arith.constant 64 : i32
    %1 = vector.broadcast %c64_i32 : i32 to vector<8x128xi32>
    %2 = arith.cmpi sge, %0, %1 : vector<8x128xi32>
    %c96_i32 = arith.constant 96 : i32
    %3 = vector.broadcast %c96_i32 : i32 to vector<8x128xi32>
    %4 = arith.cmpi slt, %0, %3 : vector<8x128xi32>
    %5 = arith.andi %2, %4 : vector<8x128xi1>
    %cst = arith.constant 1.000000e+00 : f32
    %cst_0 = arith.constant 5.000000e-01 : f32
    %6 = vector.broadcast %cst : f32 to vector<8x128xf32>
    %7 = vector.broadcast %cst_0 : f32 to vector<8x128xf32>
    %8 = arith.select %5, %6, %7 : vector<8x128xi1>, vector<8x128xf32>
    %cst_1 = arith.constant 0.000000e+00 : f32
    %cst_2 = arith.constant 5.000000e-01 : f32
    %9 = vector.broadcast %cst_1 : f32 to vector<8x128xf32>
    %10 = vector.broadcast %cst_2 : f32 to vector<8x128xf32>
    %11 = arith.select %5, %9, %10 : vector<8x128xi1>, vector<8x128xf32>
    %c0 = arith.constant 0 : index
    %c0_3 = arith.constant 0 : index
    %12 = vector.load %arg2[%c0, %c0_3] : memref<32x128xf32, #tpu.memory_space<vmem>>, vector<32x128xf32>
    %c0_4 = arith.constant 0 : index
    %c0_5 = arith.constant 0 : index
    %13 = vector.load %arg3[%c0_4, %c0_5] : memref<32x128xf32, #tpu.memory_space<vmem>>, vector<32x128xf32>
    %c0_6 = arith.constant 0 : index
    %c0_7 = arith.constant 0 : index
    %14 = vector.load %arg4[%c0_6, %c0_7] : memref<1x128xf32, #tpu.memory_space<vmem>>, vector<1x128xf32>
    %c0_8 = arith.constant 0 : index
    %c0_9 = arith.constant 0 : index
    %c0_10 = arith.constant 0 : index
    %15 = vector.load %arg1[%c0_8, %c0_9, %c0_10] : memref<1x64x32xf32, #tpu.memory_space<vmem>>, vector<1x64x32xf32>
    %16 = vector.shape_cast %15 : vector<1x64x32xf32> to vector<64x32xf32>
    %cst_11 = arith.constant dense<0.000000e+00> : vector<64x128xf32>
    %17 = tpu.matmul %16, %12, %cst_11 {dimension_numbers = #tpu.dot_dimension_numbers<[1], [0], [0], [1], [0, 0, 1, 1], [], []>} : vector<64x32xf32>, vector<32x128xf32>, vector<64x128xf32> -> vector<64x128xf32>
    %18 = vector.broadcast %14 : vector<1x128xf32> to vector<64x128xf32>
    %19 = arith.addf %17, %18 : vector<64x128xf32>
    %c0_12 = arith.constant 0 : index
    %c0_13 = arith.constant 0 : index
    %20 = vector.load %arg11[%c0_12, %c0_13] : memref<64x128xf32, #tpu.memory_space<vmem>>, vector<64x128xf32>
    tpu.vector_store %arg11[%c0_12, %c0_13], %19 {strides = array<i32>} : memref<64x128xf32, #tpu.memory_space<vmem>>, vector<64x128xf32>,
    %cst_14 = arith.constant 0.000000e+00 : f32
    %21 = vector.broadcast %cst_14 : f32 to vector<8x32xf32>
    %cst_15 = arith.constant 0.000000e+00 : f32
    %22 = vector.broadcast %cst_15 : f32 to vector<8x32xf32>
    %c0_i32 = arith.constant 0 : i32
    %c8_i32 = arith.constant 8 : i32
    %23 = arith.muli %c0_i32, %c8_i32 : i32
    %24 = tpu.assume_multiple %23, 8 : i32
    %25 = arith.index_cast %24 : i32 to index
    %c0_16 = arith.constant 0 : index
    %26 = vector.load %arg11[%25, %c0_16] : memref<64x128xf32, #tpu.memory_space<vmem>>, vector<8x128xf32>
    %cst_17 = arith.constant dense<0.000000e+00> : vector<8x128xf32>
    %27 = tpu.matmul %21, %13, %cst_17 {dimension_numbers = #tpu.dot_dimension_numbers<[1], [0], [0], [1], [0, 0, 1, 1], [], []>} : vector<8x32xf32>, vector<32x128xf32>, vector<8x128xf32> -> vector<8x128xf32>
    %28 = arith.addf %26, %27 : vector<8x128xf32>
    %29 = arith.mulf %28, %8 : vector<8x128xf32>
    %30 = math.tanh %29 : vector<8x128xf32>
    %31 = arith.mulf %30, %8 : vector<8x128xf32>
    %32 = arith.addf %31, %11 : vector<8x128xf32>
    %33 = vector.extract_strided_slice %32 {offsets = [0, 0], sizes = [8, 32], strides = [1, 1]} : vector<8x128xf32> to vector<8x32xf32>
    %34 = vector.extract_strided_slice %32 {offsets = [0, 32], sizes = [8, 32], strides = [1, 1]} : vector<8x128xf32> to vector<8x32xf32>
    %35 = vector.extract_strided_slice %32 {offsets = [0, 64], sizes = [8, 32], strides = [1, 1]} : vector<8x128xf32> to vector<8x32xf32>
    %36 = vector.extract_strided_slice %32 {offsets = [0, 96], sizes = [8, 32], strides = [1, 1]} : vector<8x128xf32> to vector<8x32xf32>
    %37 = arith.mulf %34, %22 : vector<8x32xf32>
    %38 = arith.mulf %33, %35 : vector<8x32xf32>
    %39 = arith.addf %37, %38 : vector<8x32xf32>
    %40 = math.tanh %39 : vector<8x32xf32>
    %41 = arith.mulf %36, %40 : vector<8x32xf32>
    %42 = arith.index_cast %24 : i32 to index
    %c0_18 = arith.constant 0 : index
    %43 = vector.load %arg12[%42, %c0_18] : memref<64x32xf32, #tpu.memory_space<vmem>>, vector<8x32xf32>
    tpu.vector_store %arg12[%42, %c0_18], %41 {strides = array<i32>} : memref<64x32xf32, #tpu.memory_space<vmem>>, vector<8x32xf32>,
    %c1_i32 = arith.constant 1 : i32
    %c8_i32_19 = arith.constant 8 : i32
    %44 = arith.muli %c1_i32, %c8_i32_19 : i32
    %45 = tpu.assume_multiple %44, 8 : i32
    %46 = arith.index_cast %45 : i32 to index
    %c0_20 = arith.constant 0 : index
    %47 = vector.load %arg11[%46, %c0_20] : memref<64x128xf32, #tpu.memory_space<vmem>>, vector<8x128xf32>
    %cst_21 = arith.constant dense<0.000000e+00> : vector<8x128xf32>
    %48 = tpu.matmul %41, %13, %cst_21 {dimension_numbers = #tpu.dot_dimension_numbers<[1], [0], [0], [1], [0, 0, 1, 1], [], []>} : vector<8x32xf32>, vector<32x128xf32>, vector<8x128xf32> -> vector<8x128xf32>
    %49 = arith.addf %47, %48 : vector<8x128xf32>
    %50 = arith.mulf %49, %8 : vector<8x128xf32>
    %51 = math.tanh %50 : vector<8x128xf32>
    %52 = arith.mulf %51, %8 : vector<8x128xf32>
    %53 = arith.addf %52, %11 : vector<8x128xf32>
    %54 = vector.extract_strided_slice %53 {offsets = [0, 0], sizes = [8, 32], strides = [1, 1]} : vector<8x128xf32> to vector<8x32xf32>
    %55 = vector.extract_strided_slice %53 {offsets = [0, 32], sizes = [8, 32], strides = [1, 1]} : vector<8x128xf32> to vector<8x32xf32>
    %56 = vector.extract_strided_slice %53 {offsets = [0, 64], sizes = [8, 32], strides = [1, 1]} : vector<8x128xf32> to vector<8x32xf32>
    %57 = vector.extract_strided_slice %53 {offsets = [0, 96], sizes = [8, 32], strides = [1, 1]} : vector<8x128xf32> to vector<8x32xf32>
    %58 = arith.mulf %55, %39 : vector<8x32xf32>
    %59 = arith.mulf %54, %56 : vector<8x32xf32>
    %60 = arith.addf %58, %59 : vector<8x32xf32>
    %61 = math.tanh %60 : vector<8x32xf32>
    %62 = arith.mulf %57, %61 : vector<8x32xf32>
    %63 = arith.index_cast %45 : i32 to index
    %c0_22 = arith.constant 0 : index
    %64 = vector.load %arg12[%63, %c0_22] : memref<64x32xf32, #tpu.memory_space<vmem>>, vector<8x32xf32>
    tpu.vector_store %arg12[%63, %c0_22], %62 {strides = array<i32>} : memref<64x32xf32, #tpu.memory_space<vmem>>, vector<8x32xf32>,
    %c2_i32 = arith.constant 2 : i32
    %c8_i32_23 = arith.constant 8 : i32
    %65 = arith.muli %c2_i32, %c8_i32_23 : i32
    %66 = tpu.assume_multiple %65, 8 : i32
    %67 = arith.index_cast %66 : i32 to index
    %c0_24 = arith.constant 0 : index
    %68 = vector.load %arg11[%67, %c0_24] : memref<64x128xf32, #tpu.memory_space<vmem>>, vector<8x128xf32>
    %cst_25 = arith.constant dense<0.000000e+00> : vector<8x128xf32>
    %69 = tpu.matmul %62, %13, %cst_25 {dimension_numbers = #tpu.dot_dimension_numbers<[1], [0], [0], [1], [0, 0, 1, 1], [], []>} : vector<8x32xf32>, vector<32x128xf32>, vector<8x128xf32> -> vector<8x128xf32>
    %70 = arith.addf %68, %69 : vector<8x128xf32>
    %71 = arith.mulf %70, %8 : vector<8x128xf32>
    %72 = math.tanh %71 : vector<8x128xf32>
    %73 = arith.mulf %72, %8 : vector<8x128xf32>
    %74 = arith.addf %73, %11 : vector<8x128xf32>
    %75 = vector.extract_strided_slice %74 {offsets = [0, 0], sizes = [8, 32], strides = [1, 1]} : vector<8x128xf32> to vector<8x32xf32>
    %76 = vector.extract_strided_slice %74 {offsets = [0, 32], sizes = [8, 32], strides = [1, 1]} : vector<8x128xf32> to vector<8x32xf32>
    %77 = vector.extract_strided_slice %74 {offsets = [0, 64], sizes = [8, 32], strides = [1, 1]} : vector<8x128xf32> to vector<8x32xf32>
    %78 = vector.extract_strided_slice %74 {offsets = [0, 96], sizes = [8, 32], strides = [1, 1]} : vector<8x128xf32> to vector<8x32xf32>
    %79 = arith.mulf %76, %60 : vector<8x32xf32>
    %80 = arith.mulf %75, %77 : vector<8x32xf32>
    %81 = arith.addf %79, %80 : vector<8x32xf32>
    %82 = math.tanh %81 : vector<8x32xf32>
    %83 = arith.mulf %78, %82 : vector<8x32xf32>
    %84 = arith.index_cast %66 : i32 to index
    %c0_26 = arith.constant 0 : index
    %85 = vector.load %arg12[%84, %c0_26] : memref<64x32xf32, #tpu.memory_space<vmem>>, vector<8x32xf32>
    tpu.vector_store %arg12[%84, %c0_26], %83 {strides = array<i32>} : memref<64x32xf32, #tpu.memory_space<vmem>>, vector<8x32xf32>,
    %c3_i32 = arith.constant 3 : i32
    %c8_i32_27 = arith.constant 8 : i32
    %86 = arith.muli %c3_i32, %c8_i32_27 : i32
    %87 = tpu.assume_multiple %86, 8 : i32
    %88 = arith.index_cast %87 : i32 to index
    %c0_28 = arith.constant 0 : index
    %89 = vector.load %arg11[%88, %c0_28] : memref<64x128xf32, #tpu.memory_space<vmem>>, vector<8x128xf32>
    %cst_29 = arith.constant dense<0.000000e+00> : vector<8x128xf32>
    %90 = tpu.matmul %83, %13, %cst_29 {dimension_numbers = #tpu.dot_dimension_numbers<[1], [0], [0], [1], [0, 0, 1, 1], [], []>} : vector<8x32xf32>, vector<32x128xf32>, vector<8x128xf32> -> vector<8x128xf32>
    %91 = arith.addf %89, %90 : vector<8x128xf32>
    %92 = arith.mulf %91, %8 : vector<8x128xf32>
    %93 = math.tanh %92 : vector<8x128xf32>
    %94 = arith.mulf %93, %8 : vector<8x128xf32>
    %95 = arith.addf %94, %11 : vector<8x128xf32>
    %96 = vector.extract_strided_slice %95 {offsets = [0, 0], sizes = [8, 32], strides = [1, 1]} : vector<8x128xf32> to vector<8x32xf32>
    %97 = vector.extract_strided_slice %95 {offsets = [0, 32], sizes = [8, 32], strides = [1, 1]} : vector<8x128xf32> to vector<8x32xf32>
    %98 = vector.extract_strided_slice %95 {offsets = [0, 64], sizes = [8, 32], strides = [1, 1]} : vector<8x128xf32> to vector<8x32xf32>
    %99 = vector.extract_strided_slice %95 {offsets = [0, 96], sizes = [8, 32], strides = [1, 1]} : vector<8x128xf32> to vector<8x32xf32>
    %100 = arith.mulf %97, %81 : vector<8x32xf32>
    %101 = arith.mulf %96, %98 : vector<8x32xf32>
    %102 = arith.addf %100, %101 : vector<8x32xf32>
    %103 = math.tanh %102 : vector<8x32xf32>
    %104 = arith.mulf %99, %103 : vector<8x32xf32>
    %105 = arith.index_cast %87 : i32 to index
    %c0_30 = arith.constant 0 : index
    %106 = vector.load %arg12[%105, %c0_30] : memref<64x32xf32, #tpu.memory_space<vmem>>, vector<8x32xf32>
    tpu.vector_store %arg12[%105, %c0_30], %104 {strides = array<i32>} : memref<64x32xf32, #tpu.memory_space<vmem>>, vector<8x32xf32>,
    %c4_i32 = arith.constant 4 : i32
    %c8_i32_31 = arith.constant 8 : i32
    %107 = arith.muli %c4_i32, %c8_i32_31 : i32
    %108 = tpu.assume_multiple %107, 8 : i32
    %109 = arith.index_cast %108 : i32 to index
    %c0_32 = arith.constant 0 : index
    %110 = vector.load %arg11[%109, %c0_32] : memref<64x128xf32, #tpu.memory_space<vmem>>, vector<8x128xf32>
    %cst_33 = arith.constant dense<0.000000e+00> : vector<8x128xf32>
    %111 = tpu.matmul %104, %13, %cst_33 {dimension_numbers = #tpu.dot_dimension_numbers<[1], [0], [0], [1], [0, 0, 1, 1], [], []>} : vector<8x32xf32>, vector<32x128xf32>, vector<8x128xf32> -> vector<8x128xf32>
    %112 = arith.addf %110, %111 : vector<8x128xf32>
    %113 = arith.mulf %112, %8 : vector<8x128xf32>
    %114 = math.tanh %113 : vector<8x128xf32>
    %115 = arith.mulf %114, %8 : vector<8x128xf32>
    %116 = arith.addf %115, %11 : vector<8x128xf32>
    %117 = vector.extract_strided_slice %116 {offsets = [0, 0], sizes = [8, 32], strides = [1, 1]} : vector<8x128xf32> to vector<8x32xf32>
    %118 = vector.extract_strided_slice %116 {offsets = [0, 32], sizes = [8, 32], strides = [1, 1]} : vector<8x128xf32> to vector<8x32xf32>
    %119 = vector.extract_strided_slice %116 {offsets = [0, 64], sizes = [8, 32], strides = [1, 1]} : vector<8x128xf32> to vector<8x32xf32>
    %120 = vector.extract_strided_slice %116 {offsets = [0, 96], sizes = [8, 32], strides = [1, 1]} : vector<8x128xf32> to vector<8x32xf32>
    %121 = arith.mulf %118, %102 : vector<8x32xf32>
    %122 = arith.mulf %117, %119 : vector<8x32xf32>
    %123 = arith.addf %121, %122 : vector<8x32xf32>
    %124 = math.tanh %123 : vector<8x32xf32>
    %125 = arith.mulf %120, %124 : vector<8x32xf32>
    %126 = arith.index_cast %108 : i32 to index
    %c0_34 = arith.constant 0 : index
    %127 = vector.load %arg12[%126, %c0_34] : memref<64x32xf32, #tpu.memory_space<vmem>>, vector<8x32xf32>
    tpu.vector_store %arg12[%126, %c0_34], %125 {strides = array<i32>} : memref<64x32xf32, #tpu.memory_space<vmem>>, vector<8x32xf32>,
    %c5_i32 = arith.constant 5 : i32
    %c8_i32_35 = arith.constant 8 : i32
    %128 = arith.muli %c5_i32, %c8_i32_35 : i32
    %129 = tpu.assume_multiple %128, 8 : i32
    %130 = arith.index_cast %129 : i32 to index
    %c0_36 = arith.constant 0 : index
    %131 = vector.load %arg11[%130, %c0_36] : memref<64x128xf32, #tpu.memory_space<vmem>>, vector<8x128xf32>
    %cst_37 = arith.constant dense<0.000000e+00> : vector<8x128xf32>
    %132 = tpu.matmul %125, %13, %cst_37 {dimension_numbers = #tpu.dot_dimension_numbers<[1], [0], [0], [1], [0, 0, 1, 1], [], []>} : vector<8x32xf32>, vector<32x128xf32>, vector<8x128xf32> -> vector<8x128xf32>
    %133 = arith.addf %131, %132 : vector<8x128xf32>
    %134 = arith.mulf %133, %8 : vector<8x128xf32>
    %135 = math.tanh %134 : vector<8x128xf32>
    %136 = arith.mulf %135, %8 : vector<8x128xf32>
    %137 = arith.addf %136, %11 : vector<8x128xf32>
    %138 = vector.extract_strided_slice %137 {offsets = [0, 0], sizes = [8, 32], strides = [1, 1]} : vector<8x128xf32> to vector<8x32xf32>
    %139 = vector.extract_strided_slice %137 {offsets = [0, 32], sizes = [8, 32], strides = [1, 1]} : vector<8x128xf32> to vector<8x32xf32>
    %140 = vector.extract_strided_slice %137 {offsets = [0, 64], sizes = [8, 32], strides = [1, 1]} : vector<8x128xf32> to vector<8x32xf32>
    %141 = vector.extract_strided_slice %137 {offsets = [0, 96], sizes = [8, 32], strides = [1, 1]} : vector<8x128xf32> to vector<8x32xf32>
    %142 = arith.mulf %139, %123 : vector<8x32xf32>
    %143 = arith.mulf %138, %140 : vector<8x32xf32>
    %144 = arith.addf %142, %143 : vector<8x32xf32>
    %145 = math.tanh %144 : vector<8x32xf32>
    %146 = arith.mulf %141, %145 : vector<8x32xf32>
    %147 = arith.index_cast %129 : i32 to index
    %c0_38 = arith.constant 0 : index
    %148 = vector.load %arg12[%147, %c0_38] : memref<64x32xf32, #tpu.memory_space<vmem>>, vector<8x32xf32>
    tpu.vector_store %arg12[%147, %c0_38], %146 {strides = array<i32>} : memref<64x32xf32, #tpu.memory_space<vmem>>, vector<8x32xf32>,
    %c6_i32 = arith.constant 6 : i32
    %c8_i32_39 = arith.constant 8 : i32
    %149 = arith.muli %c6_i32, %c8_i32_39 : i32
    %150 = tpu.assume_multiple %149, 8 : i32
    %151 = arith.index_cast %150 : i32 to index
    %c0_40 = arith.constant 0 : index
    %152 = vector.load %arg11[%151, %c0_40] : memref<64x128xf32, #tpu.memory_space<vmem>>, vector<8x128xf32>
    %cst_41 = arith.constant dense<0.000000e+00> : vector<8x128xf32>
    %153 = tpu.matmul %146, %13, %cst_41 {dimension_numbers = #tpu.dot_dimension_numbers<[1], [0], [0], [1], [0, 0, 1, 1], [], []>} : vector<8x32xf32>, vector<32x128xf32>, vector<8x128xf32> -> vector<8x128xf32>
    %154 = arith.addf %152, %153 : vector<8x128xf32>
    %155 = arith.mulf %154, %8 : vector<8x128xf32>
    %156 = math.tanh %155 : vector<8x128xf32>
    %157 = arith.mulf %156, %8 : vector<8x128xf32>
    %158 = arith.addf %157, %11 : vector<8x128xf32>
    %159 = vector.extract_strided_slice %158 {offsets = [0, 0], sizes = [8, 32], strides = [1, 1]} : vector<8x128xf32> to vector<8x32xf32>
    %160 = vector.extract_strided_slice %158 {offsets = [0, 32], sizes = [8, 32], strides = [1, 1]} : vector<8x128xf32> to vector<8x32xf32>
    %161 = vector.extract_strided_slice %158 {offsets = [0, 64], sizes = [8, 32], strides = [1, 1]} : vector<8x128xf32> to vector<8x32xf32>
    %162 = vector.extract_strided_slice %158 {offsets = [0, 96], sizes = [8, 32], strides = [1, 1]} : vector<8x128xf32> to vector<8x32xf32>
    %163 = arith.mulf %160, %144 : vector<8x32xf32>
    %164 = arith.mulf %159, %161 : vector<8x32xf32>
    %165 = arith.addf %163, %164 : vector<8x32xf32>
    %166 = math.tanh %165 : vector<8x32xf32>
    %167 = arith.mulf %162, %166 : vector<8x32xf32>
    %168 = arith.index_cast %150 : i32 to index
    %c0_42 = arith.constant 0 : index
    %169 = vector.load %arg12[%168, %c0_42] : memref<64x32xf32, #tpu.memory_space<vmem>>, vector<8x32xf32>
    tpu.vector_store %arg12[%168, %c0_42], %167 {strides = array<i32>} : memref<64x32xf32, #tpu.memory_space<vmem>>, vector<8x32xf32>,
    %c7_i32 = arith.constant 7 : i32
    %c8_i32_43 = arith.constant 8 : i32
    %170 = arith.muli %c7_i32, %c8_i32_43 : i32
    %171 = tpu.assume_multiple %170, 8 : i32
    %172 = arith.index_cast %171 : i32 to index
    %c0_44 = arith.constant 0 : index
    %173 = vector.load %arg11[%172, %c0_44] : memref<64x128xf32, #tpu.memory_space<vmem>>, vector<8x128xf32>
    %cst_45 = arith.constant dense<0.000000e+00> : vector<8x128xf32>
    %174 = tpu.matmul %167, %13, %cst_45 {dimension_numbers = #tpu.dot_dimension_numbers<[1], [0], [0], [1], [0, 0, 1, 1], [], []>} : vector<8x32xf32>, vector<32x128xf32>, vector<8x128xf32> -> vector<8x128xf32>
    %175 = arith.addf %173, %174 : vector<8x128xf32>
    %176 = arith.mulf %175, %8 : vector<8x128xf32>
    %177 = math.tanh %176 : vector<8x128xf32>
    %178 = arith.mulf %177, %8 : vector<8x128xf32>
    %179 = arith.addf %178, %11 : vector<8x128xf32>
    %180 = vector.extract_strided_slice %179 {offsets = [0, 0], sizes = [8, 32], strides = [1, 1]} : vector<8x128xf32> to vector<8x32xf32>
    %181 = vector.extract_strided_slice %179 {offsets = [0, 32], sizes = [8, 32], strides = [1, 1]} : vector<8x128xf32> to vector<8x32xf32>
    %182 = vector.extract_strided_slice %179 {offsets = [0, 64], sizes = [8, 32], strides = [1, 1]} : vector<8x128xf32> to vector<8x32xf32>
    %183 = vector.extract_strided_slice %179 {offsets = [0, 96], sizes = [8, 32], strides = [1, 1]} : vector<8x128xf32> to vector<8x32xf32>
    %184 = arith.mulf %181, %165 : vector<8x32xf32>
    %185 = arith.mulf %180, %182 : vector<8x32xf32>
    %186 = arith.addf %184, %185 : vector<8x32xf32>
    %187 = math.tanh %186 : vector<8x32xf32>
    %188 = arith.mulf %183, %187 : vector<8x32xf32>
    %189 = arith.index_cast %171 : i32 to index
    %c0_46 = arith.constant 0 : index
    %190 = vector.load %arg12[%189, %c0_46] : memref<64x32xf32, #tpu.memory_space<vmem>>, vector<8x32xf32>
    tpu.vector_store %arg12[%189, %c0_46], %188 {strides = array<i32>} : memref<64x32xf32, #tpu.memory_space<vmem>>, vector<8x32xf32>,
    %c8_i32_47 = arith.constant 8 : i32
    %c0_48 = arith.constant 0 : index
    %c0_49 = arith.constant 0 : index
    %191 = vector.load %arg5[%c0_48, %c0_49] : memref<32x128xf32, #tpu.memory_space<vmem>>, vector<32x128xf32>
    %c0_50 = arith.constant 0 : index
    %c0_51 = arith.constant 0 : index
    %192 = vector.load %arg6[%c0_50, %c0_51] : memref<32x128xf32, #tpu.memory_space<vmem>>, vector<32x128xf32>
    %c0_52 = arith.constant 0 : index
    %c0_53 = arith.constant 0 : index
    %193 = vector.load %arg7[%c0_52, %c0_53] : memref<1x128xf32, #tpu.memory_space<vmem>>, vector<1x128xf32>
    %c0_54 = arith.constant 0 : index
    %c0_55 = arith.constant 0 : index
    %194 = vector.load %arg12[%c0_54, %c0_55] : memref<64x32xf32, #tpu.memory_space<vmem>>, vector<64x32xf32>
    %cst_56 = arith.constant dense<0.000000e+00> : vector<64x128xf32>
    %195 = tpu.matmul %194, %191, %cst_56 {dimension_numbers = #tpu.dot_dimension_numbers<[1], [0], [0], [1], [0, 0, 1, 1], [], []>} : vector<64x32xf32>, vector<32x128xf32>, vector<64x128xf32> -> vector<64x128xf32>
    %196 = vector.broadcast %193 : vector<1x128xf32> to vector<64x128xf32>
    %197 = arith.addf %195, %196 : vector<64x128xf32>
    %c0_57 = arith.constant 0 : index
    %c0_58 = arith.constant 0 : index
    %198 = vector.load %arg11[%c0_57, %c0_58] : memref<64x128xf32, #tpu.memory_space<vmem>>, vector<64x128xf32>
    tpu.vector_store %arg11[%c0_57, %c0_58], %197 {strides = array<i32>} : memref<64x128xf32, #tpu.memory_space<vmem>>, vector<64x128xf32>,
    %cst_59 = arith.constant 0.000000e+00 : f32
    %199 = vector.broadcast %cst_59 : f32 to vector<8x32xf32>
    %cst_60 = arith.constant 0.000000e+00 : f32
    %200 = vector.broadcast %cst_60 : f32 to vector<8x32xf32>
    %c0_i32_61 = arith.constant 0 : i32
    %c8_i32_62 = arith.constant 8 : i32
    %201 = arith.muli %c0_i32_61, %c8_i32_62 : i32
    %202 = tpu.assume_multiple %201, 8 : i32
    %203 = arith.index_cast %202 : i32 to index
    %c0_63 = arith.constant 0 : index
    %204 = vector.load %arg11[%203, %c0_63] : memref<64x128xf32, #tpu.memory_space<vmem>>, vector<8x128xf32>
    %cst_64 = arith.constant dense<0.000000e+00> : vector<8x128xf32>
    %205 = tpu.matmul %199, %192, %cst_64 {dimension_numbers = #tpu.dot_dimension_numbers<[1], [0], [0], [1], [0, 0, 1, 1], [], []>} : vector<8x32xf32>, vector<32x128xf32>, vector<8x128xf32> -> vector<8x128xf32>
    %206 = arith.addf %204, %205 : vector<8x128xf32>
    %207 = arith.mulf %206, %8 : vector<8x128xf32>
    %208 = math.tanh %207 : vector<8x128xf32>
    %209 = arith.mulf %208, %8 : vector<8x128xf32>
    %210 = arith.addf %209, %11 : vector<8x128xf32>
    %211 = vector.extract_strided_slice %210 {offsets = [0, 0], sizes = [8, 32], strides = [1, 1]} : vector<8x128xf32> to vector<8x32xf32>
    %212 = vector.extract_strided_slice %210 {offsets = [0, 32], sizes = [8, 32], strides = [1, 1]} : vector<8x128xf32> to vector<8x32xf32>
    %213 = vector.extract_strided_slice %210 {offsets = [0, 64], sizes = [8, 32], strides = [1, 1]} : vector<8x128xf32> to vector<8x32xf32>
    %214 = vector.extract_strided_slice %210 {offsets = [0, 96], sizes = [8, 32], strides = [1, 1]} : vector<8x128xf32> to vector<8x32xf32>
    %215 = arith.mulf %212, %200 : vector<8x32xf32>
    %216 = arith.mulf %211, %213 : vector<8x32xf32>
    %217 = arith.addf %215, %216 : vector<8x32xf32>
    %218 = math.tanh %217 : vector<8x32xf32>
    %219 = arith.mulf %214, %218 : vector<8x32xf32>
    %220 = arith.index_cast %202 : i32 to index
    %c0_65 = arith.constant 0 : index
    %221 = vector.load %arg12[%220, %c0_65] : memref<64x32xf32, #tpu.memory_space<vmem>>, vector<8x32xf32>
    tpu.vector_store %arg12[%220, %c0_65], %219 {strides = array<i32>} : memref<64x32xf32, #tpu.memory_space<vmem>>, vector<8x32xf32>,
    %c1_i32_66 = arith.constant 1 : i32
    %c8_i32_67 = arith.constant 8 : i32
    %222 = arith.muli %c1_i32_66, %c8_i32_67 : i32
    %223 = tpu.assume_multiple %222, 8 : i32
    %224 = arith.index_cast %223 : i32 to index
    %c0_68 = arith.constant 0 : index
    %225 = vector.load %arg11[%224, %c0_68] : memref<64x128xf32, #tpu.memory_space<vmem>>, vector<8x128xf32>
    %cst_69 = arith.constant dense<0.000000e+00> : vector<8x128xf32>
    %226 = tpu.matmul %219, %192, %cst_69 {dimension_numbers = #tpu.dot_dimension_numbers<[1], [0], [0], [1], [0, 0, 1, 1], [], []>} : vector<8x32xf32>, vector<32x128xf32>, vector<8x128xf32> -> vector<8x128xf32>
    %227 = arith.addf %225, %226 : vector<8x128xf32>
    %228 = arith.mulf %227, %8 : vector<8x128xf32>
    %229 = math.tanh %228 : vector<8x128xf32>
    %230 = arith.mulf %229, %8 : vector<8x128xf32>
    %231 = arith.addf %230, %11 : vector<8x128xf32>
    %232 = vector.extract_strided_slice %231 {offsets = [0, 0], sizes = [8, 32], strides = [1, 1]} : vector<8x128xf32> to vector<8x32xf32>
    %233 = vector.extract_strided_slice %231 {offsets = [0, 32], sizes = [8, 32], strides = [1, 1]} : vector<8x128xf32> to vector<8x32xf32>
    %234 = vector.extract_strided_slice %231 {offsets = [0, 64], sizes = [8, 32], strides = [1, 1]} : vector<8x128xf32> to vector<8x32xf32>
    %235 = vector.extract_strided_slice %231 {offsets = [0, 96], sizes = [8, 32], strides = [1, 1]} : vector<8x128xf32> to vector<8x32xf32>
    %236 = arith.mulf %233, %217 : vector<8x32xf32>
    %237 = arith.mulf %232, %234 : vector<8x32xf32>
    %238 = arith.addf %236, %237 : vector<8x32xf32>
    %239 = math.tanh %238 : vector<8x32xf32>
    %240 = arith.mulf %235, %239 : vector<8x32xf32>
    %241 = arith.index_cast %223 : i32 to index
    %c0_70 = arith.constant 0 : index
    %242 = vector.load %arg12[%241, %c0_70] : memref<64x32xf32, #tpu.memory_space<vmem>>, vector<8x32xf32>
    tpu.vector_store %arg12[%241, %c0_70], %240 {strides = array<i32>} : memref<64x32xf32, #tpu.memory_space<vmem>>, vector<8x32xf32>,
    %c2_i32_71 = arith.constant 2 : i32
    %c8_i32_72 = arith.constant 8 : i32
    %243 = arith.muli %c2_i32_71, %c8_i32_72 : i32
    %244 = tpu.assume_multiple %243, 8 : i32
    %245 = arith.index_cast %244 : i32 to index
    %c0_73 = arith.constant 0 : index
    %246 = vector.load %arg11[%245, %c0_73] : memref<64x128xf32, #tpu.memory_space<vmem>>, vector<8x128xf32>
    %cst_74 = arith.constant dense<0.000000e+00> : vector<8x128xf32>
    %247 = tpu.matmul %240, %192, %cst_74 {dimension_numbers = #tpu.dot_dimension_numbers<[1], [0], [0], [1], [0, 0, 1, 1], [], []>} : vector<8x32xf32>, vector<32x128xf32>, vector<8x128xf32> -> vector<8x128xf32>
    %248 = arith.addf %246, %247 : vector<8x128xf32>
    %249 = arith.mulf %248, %8 : vector<8x128xf32>
    %250 = math.tanh %249 : vector<8x128xf32>
    %251 = arith.mulf %250, %8 : vector<8x128xf32>
    %252 = arith.addf %251, %11 : vector<8x128xf32>
    %253 = vector.extract_strided_slice %252 {offsets = [0, 0], sizes = [8, 32], strides = [1, 1]} : vector<8x128xf32> to vector<8x32xf32>
    %254 = vector.extract_strided_slice %252 {offsets = [0, 32], sizes = [8, 32], strides = [1, 1]} : vector<8x128xf32> to vector<8x32xf32>
    %255 = vector.extract_strided_slice %252 {offsets = [0, 64], sizes = [8, 32], strides = [1, 1]} : vector<8x128xf32> to vector<8x32xf32>
    %256 = vector.extract_strided_slice %252 {offsets = [0, 96], sizes = [8, 32], strides = [1, 1]} : vector<8x128xf32> to vector<8x32xf32>
    %257 = arith.mulf %254, %238 : vector<8x32xf32>
    %258 = arith.mulf %253, %255 : vector<8x32xf32>
    %259 = arith.addf %257, %258 : vector<8x32xf32>
    %260 = math.tanh %259 : vector<8x32xf32>
    %261 = arith.mulf %256, %260 : vector<8x32xf32>
    %262 = arith.index_cast %244 : i32 to index
    %c0_75 = arith.constant 0 : index
    %263 = vector.load %arg12[%262, %c0_75] : memref<64x32xf32, #tpu.memory_space<vmem>>, vector<8x32xf32>
    tpu.vector_store %arg12[%262, %c0_75], %261 {strides = array<i32>} : memref<64x32xf32, #tpu.memory_space<vmem>>, vector<8x32xf32>,
    %c3_i32_76 = arith.constant 3 : i32
    %c8_i32_77 = arith.constant 8 : i32
    %264 = arith.muli %c3_i32_76, %c8_i32_77 : i32
    %265 = tpu.assume_multiple %264, 8 : i32
    %266 = arith.index_cast %265 : i32 to index
    %c0_78 = arith.constant 0 : index
    %267 = vector.load %arg11[%266, %c0_78] : memref<64x128xf32, #tpu.memory_space<vmem>>, vector<8x128xf32>
    %cst_79 = arith.constant dense<0.000000e+00> : vector<8x128xf32>
    %268 = tpu.matmul %261, %192, %cst_79 {dimension_numbers = #tpu.dot_dimension_numbers<[1], [0], [0], [1], [0, 0, 1, 1], [], []>} : vector<8x32xf32>, vector<32x128xf32>, vector<8x128xf32> -> vector<8x128xf32>
    %269 = arith.addf %267, %268 : vector<8x128xf32>
    %270 = arith.mulf %269, %8 : vector<8x128xf32>
    %271 = math.tanh %270 : vector<8x128xf32>
    %272 = arith.mulf %271, %8 : vector<8x128xf32>
    %273 = arith.addf %272, %11 : vector<8x128xf32>
    %274 = vector.extract_strided_slice %273 {offsets = [0, 0], sizes = [8, 32], strides = [1, 1]} : vector<8x128xf32> to vector<8x32xf32>
    %275 = vector.extract_strided_slice %273 {offsets = [0, 32], sizes = [8, 32], strides = [1, 1]} : vector<8x128xf32> to vector<8x32xf32>
    %276 = vector.extract_strided_slice %273 {offsets = [0, 64], sizes = [8, 32], strides = [1, 1]} : vector<8x128xf32> to vector<8x32xf32>
    %277 = vector.extract_strided_slice %273 {offsets = [0, 96], sizes = [8, 32], strides = [1, 1]} : vector<8x128xf32> to vector<8x32xf32>
    %278 = arith.mulf %275, %259 : vector<8x32xf32>
    %279 = arith.mulf %274, %276 : vector<8x32xf32>
    %280 = arith.addf %278, %279 : vector<8x32xf32>
    %281 = math.tanh %280 : vector<8x32xf32>
    %282 = arith.mulf %277, %281 : vector<8x32xf32>
    %283 = arith.index_cast %265 : i32 to index
    %c0_80 = arith.constant 0 : index
    %284 = vector.load %arg12[%283, %c0_80] : memref<64x32xf32, #tpu.memory_space<vmem>>, vector<8x32xf32>
    tpu.vector_store %arg12[%283, %c0_80], %282 {strides = array<i32>} : memref<64x32xf32, #tpu.memory_space<vmem>>, vector<8x32xf32>,
    %c4_i32_81 = arith.constant 4 : i32
    %c8_i32_82 = arith.constant 8 : i32
    %285 = arith.muli %c4_i32_81, %c8_i32_82 : i32
    %286 = tpu.assume_multiple %285, 8 : i32
    %287 = arith.index_cast %286 : i32 to index
    %c0_83 = arith.constant 0 : index
    %288 = vector.load %arg11[%287, %c0_83] : memref<64x128xf32, #tpu.memory_space<vmem>>, vector<8x128xf32>
    %cst_84 = arith.constant dense<0.000000e+00> : vector<8x128xf32>
    %289 = tpu.matmul %282, %192, %cst_84 {dimension_numbers = #tpu.dot_dimension_numbers<[1], [0], [0], [1], [0, 0, 1, 1], [], []>} : vector<8x32xf32>, vector<32x128xf32>, vector<8x128xf32> -> vector<8x128xf32>
    %290 = arith.addf %288, %289 : vector<8x128xf32>
    %291 = arith.mulf %290, %8 : vector<8x128xf32>
    %292 = math.tanh %291 : vector<8x128xf32>
    %293 = arith.mulf %292, %8 : vector<8x128xf32>
    %294 = arith.addf %293, %11 : vector<8x128xf32>
    %295 = vector.extract_strided_slice %294 {offsets = [0, 0], sizes = [8, 32], strides = [1, 1]} : vector<8x128xf32> to vector<8x32xf32>
    %296 = vector.extract_strided_slice %294 {offsets = [0, 32], sizes = [8, 32], strides = [1, 1]} : vector<8x128xf32> to vector<8x32xf32>
    %297 = vector.extract_strided_slice %294 {offsets = [0, 64], sizes = [8, 32], strides = [1, 1]} : vector<8x128xf32> to vector<8x32xf32>
    %298 = vector.extract_strided_slice %294 {offsets = [0, 96], sizes = [8, 32], strides = [1, 1]} : vector<8x128xf32> to vector<8x32xf32>
    %299 = arith.mulf %296, %280 : vector<8x32xf32>
    %300 = arith.mulf %295, %297 : vector<8x32xf32>
    %301 = arith.addf %299, %300 : vector<8x32xf32>
    %302 = math.tanh %301 : vector<8x32xf32>
    %303 = arith.mulf %298, %302 : vector<8x32xf32>
    %304 = arith.index_cast %286 : i32 to index
    %c0_85 = arith.constant 0 : index
    %305 = vector.load %arg12[%304, %c0_85] : memref<64x32xf32, #tpu.memory_space<vmem>>, vector<8x32xf32>
    tpu.vector_store %arg12[%304, %c0_85], %303 {strides = array<i32>} : memref<64x32xf32, #tpu.memory_space<vmem>>, vector<8x32xf32>,
    %c5_i32_86 = arith.constant 5 : i32
    %c8_i32_87 = arith.constant 8 : i32
    %306 = arith.muli %c5_i32_86, %c8_i32_87 : i32
    %307 = tpu.assume_multiple %306, 8 : i32
    %308 = arith.index_cast %307 : i32 to index
    %c0_88 = arith.constant 0 : index
    %309 = vector.load %arg11[%308, %c0_88] : memref<64x128xf32, #tpu.memory_space<vmem>>, vector<8x128xf32>
    %cst_89 = arith.constant dense<0.000000e+00> : vector<8x128xf32>
    %310 = tpu.matmul %303, %192, %cst_89 {dimension_numbers = #tpu.dot_dimension_numbers<[1], [0], [0], [1], [0, 0, 1, 1], [], []>} : vector<8x32xf32>, vector<32x128xf32>, vector<8x128xf32> -> vector<8x128xf32>
    %311 = arith.addf %309, %310 : vector<8x128xf32>
    %312 = arith.mulf %311, %8 : vector<8x128xf32>
    %313 = math.tanh %312 : vector<8x128xf32>
    %314 = arith.mulf %313, %8 : vector<8x128xf32>
    %315 = arith.addf %314, %11 : vector<8x128xf32>
    %316 = vector.extract_strided_slice %315 {offsets = [0, 0], sizes = [8, 32], strides = [1, 1]} : vector<8x128xf32> to vector<8x32xf32>
    %317 = vector.extract_strided_slice %315 {offsets = [0, 32], sizes = [8, 32], strides = [1, 1]} : vector<8x128xf32> to vector<8x32xf32>
    %318 = vector.extract_strided_slice %315 {offsets = [0, 64], sizes = [8, 32], strides = [1, 1]} : vector<8x128xf32> to vector<8x32xf32>
    %319 = vector.extract_strided_slice %315 {offsets = [0, 96], sizes = [8, 32], strides = [1, 1]} : vector<8x128xf32> to vector<8x32xf32>
    %320 = arith.mulf %317, %301 : vector<8x32xf32>
    %321 = arith.mulf %316, %318 : vector<8x32xf32>
    %322 = arith.addf %320, %321 : vector<8x32xf32>
    %323 = math.tanh %322 : vector<8x32xf32>
    %324 = arith.mulf %319, %323 : vector<8x32xf32>
    %325 = arith.index_cast %307 : i32 to index
    %c0_90 = arith.constant 0 : index
    %326 = vector.load %arg12[%325, %c0_90] : memref<64x32xf32, #tpu.memory_space<vmem>>, vector<8x32xf32>
    tpu.vector_store %arg12[%325, %c0_90], %324 {strides = array<i32>} : memref<64x32xf32, #tpu.memory_space<vmem>>, vector<8x32xf32>,
    %c6_i32_91 = arith.constant 6 : i32
    %c8_i32_92 = arith.constant 8 : i32
    %327 = arith.muli %c6_i32_91, %c8_i32_92 : i32
    %328 = tpu.assume_multiple %327, 8 : i32
    %329 = arith.index_cast %328 : i32 to index
    %c0_93 = arith.constant 0 : index
    %330 = vector.load %arg11[%329, %c0_93] : memref<64x128xf32, #tpu.memory_space<vmem>>, vector<8x128xf32>
    %cst_94 = arith.constant dense<0.000000e+00> : vector<8x128xf32>
    %331 = tpu.matmul %324, %192, %cst_94 {dimension_numbers = #tpu.dot_dimension_numbers<[1], [0], [0], [1], [0, 0, 1, 1], [], []>} : vector<8x32xf32>, vector<32x128xf32>, vector<8x128xf32> -> vector<8x128xf32>
    %332 = arith.addf %330, %331 : vector<8x128xf32>
    %333 = arith.mulf %332, %8 : vector<8x128xf32>
    %334 = math.tanh %333 : vector<8x128xf32>
    %335 = arith.mulf %334, %8 : vector<8x128xf32>
    %336 = arith.addf %335, %11 : vector<8x128xf32>
    %337 = vector.extract_strided_slice %336 {offsets = [0, 0], sizes = [8, 32], strides = [1, 1]} : vector<8x128xf32> to vector<8x32xf32>
    %338 = vector.extract_strided_slice %336 {offsets = [0, 32], sizes = [8, 32], strides = [1, 1]} : vector<8x128xf32> to vector<8x32xf32>
    %339 = vector.extract_strided_slice %336 {offsets = [0, 64], sizes = [8, 32], strides = [1, 1]} : vector<8x128xf32> to vector<8x32xf32>
    %340 = vector.extract_strided_slice %336 {offsets = [0, 96], sizes = [8, 32], strides = [1, 1]} : vector<8x128xf32> to vector<8x32xf32>
    %341 = arith.mulf %338, %322 : vector<8x32xf32>
    %342 = arith.mulf %337, %339 : vector<8x32xf32>
    %343 = arith.addf %341, %342 : vector<8x32xf32>
    %344 = math.tanh %343 : vector<8x32xf32>
    %345 = arith.mulf %340, %344 : vector<8x32xf32>
    %346 = arith.index_cast %328 : i32 to index
    %c0_95 = arith.constant 0 : index
    %347 = vector.load %arg12[%346, %c0_95] : memref<64x32xf32, #tpu.memory_space<vmem>>, vector<8x32xf32>
    tpu.vector_store %arg12[%346, %c0_95], %345 {strides = array<i32>} : memref<64x32xf32, #tpu.memory_space<vmem>>, vector<8x32xf32>,
    %c7_i32_96 = arith.constant 7 : i32
    %c8_i32_97 = arith.constant 8 : i32
    %348 = arith.muli %c7_i32_96, %c8_i32_97 : i32
    %349 = tpu.assume_multiple %348, 8 : i32
    %350 = arith.index_cast %349 : i32 to index
    %c0_98 = arith.constant 0 : index
    %351 = vector.load %arg11[%350, %c0_98] : memref<64x128xf32, #tpu.memory_space<vmem>>, vector<8x128xf32>
    %cst_99 = arith.constant dense<0.000000e+00> : vector<8x128xf32>
    %352 = tpu.matmul %345, %192, %cst_99 {dimension_numbers = #tpu.dot_dimension_numbers<[1], [0], [0], [1], [0, 0, 1, 1], [], []>} : vector<8x32xf32>, vector<32x128xf32>, vector<8x128xf32> -> vector<8x128xf32>
    %353 = arith.addf %351, %352 : vector<8x128xf32>
    %354 = arith.mulf %353, %8 : vector<8x128xf32>
    %355 = math.tanh %354 : vector<8x128xf32>
    %356 = arith.mulf %355, %8 : vector<8x128xf32>
    %357 = arith.addf %356, %11 : vector<8x128xf32>
    %358 = vector.extract_strided_slice %357 {offsets = [0, 0], sizes = [8, 32], strides = [1, 1]} : vector<8x128xf32> to vector<8x32xf32>
    %359 = vector.extract_strided_slice %357 {offsets = [0, 32], sizes = [8, 32], strides = [1, 1]} : vector<8x128xf32> to vector<8x32xf32>
    %360 = vector.extract_strided_slice %357 {offsets = [0, 64], sizes = [8, 32], strides = [1, 1]} : vector<8x128xf32> to vector<8x32xf32>
    %361 = vector.extract_strided_slice %357 {offsets = [0, 96], sizes = [8, 32], strides = [1, 1]} : vector<8x128xf32> to vector<8x32xf32>
    %362 = arith.mulf %359, %343 : vector<8x32xf32>
    %363 = arith.mulf %358, %360 : vector<8x32xf32>
    %364 = arith.addf %362, %363 : vector<8x32xf32>
    %365 = math.tanh %364 : vector<8x32xf32>
    %366 = arith.mulf %361, %365 : vector<8x32xf32>
    %367 = arith.index_cast %349 : i32 to index
    %c0_100 = arith.constant 0 : index
    %368 = vector.load %arg12[%367, %c0_100] : memref<64x32xf32, #tpu.memory_space<vmem>>, vector<8x32xf32>
    tpu.vector_store %arg12[%367, %c0_100], %366 {strides = array<i32>} : memref<64x32xf32, #tpu.memory_space<vmem>>, vector<8x32xf32>,
    %c8_i32_101 = arith.constant 8 : i32
    %c0_102 = arith.constant 0 : index
    %c0_103 = arith.constant 0 : index
    %369 = vector.load %arg8[%c0_102, %c0_103] : memref<32x128xf32, #tpu.memory_space<vmem>>, vector<32x128xf32>
    %c0_104 = arith.constant 0 : index
    %c0_105 = arith.constant 0 : index
    %370 = vector.load %arg9[%c0_104, %c0_105] : memref<1x128xf32, #tpu.memory_space<vmem>>, vector<1x128xf32>
    %c0_106 = arith.constant 0 : index
    %c0_107 = arith.constant 0 : index
    %371 = vector.load %arg12[%c0_106, %c0_107] : memref<64x32xf32, #tpu.memory_space<vmem>>, vector<64x32xf32>
    %cst_108 = arith.constant dense<0.000000e+00> : vector<64x128xf32>
    %372 = tpu.matmul %371, %369, %cst_108 {dimension_numbers = #tpu.dot_dimension_numbers<[1], [0], [0], [1], [0, 0, 1, 1], [], []>} : vector<64x32xf32>, vector<32x128xf32>, vector<64x128xf32> -> vector<64x128xf32>
    %373 = vector.broadcast %370 : vector<1x128xf32> to vector<64x128xf32>
    %374 = arith.addf %372, %373 : vector<64x128xf32>
    %c0_109 = arith.constant 0 : index
    %c0_110 = arith.constant 0 : index
    %c0_111 = arith.constant 0 : index
    %375 = vector.load %arg10[%c0_109, %c0_110, %c0_111] : memref<1x64x128xf32, #tpu.memory_space<vmem>>, vector<1x64x128xf32>
    %376 = vector.shape_cast %375 : vector<1x64x128xf32> to vector<64x128xf32>
    %377 = vector.shape_cast %374 : vector<64x128xf32> to vector<1x64x128xf32>
    tpu.vector_store %arg10[%c0_109, %c0_110, %c0_111], %377 {strides = array<i32>} : memref<1x64x128xf32, #tpu.memory_space<vmem>>, vector<1x64x128xf32>,
    return
  }
  func.func @transform_0(%arg0: i32) -> (i32, i32, i32) {
    %c0_i32 = arith.constant 0 : i32
    %c0_i32_0 = arith.constant 0 : i32
    %c0_i32_1 = arith.constant 0 : i32
    return %arg0, %c0_i32, %c0_i32_0 : i32, i32, i32
  }
  func.func @transform_1(%arg0: i32) -> (i32, i32) {
    %c0_i32 = arith.constant 0 : i32
    %c0_i32_0 = arith.constant 0 : i32
    %c0_i32_1 = arith.constant 0 : i32
    return %c0_i32, %c0_i32_0 : i32, i32
  }
  func.func @transform_2(%arg0: i32) -> (i32, i32) {
    %c0_i32 = arith.constant 0 : i32
    %c0_i32_0 = arith.constant 0 : i32
    %c0_i32_1 = arith.constant 0 : i32
    return %c0_i32, %c0_i32_0 : i32, i32
  }
  func.func @transform_3(%arg0: i32) -> (i32, i32) {
    %c0_i32 = arith.constant 0 : i32
    %c0_i32_0 = arith.constant 0 : i32
    %c0_i32_1 = arith.constant 0 : i32
    return %c0_i32, %c0_i32_0 : i32, i32
  }
  func.func @transform_4(%arg0: i32) -> (i32, i32) {
    %c0_i32 = arith.constant 0 : i32
    %c0_i32_0 = arith.constant 0 : i32
    %c0_i32_1 = arith.constant 0 : i32
    return %c0_i32, %c0_i32_0 : i32, i32
  }
  func.func @transform_5(%arg0: i32) -> (i32, i32) {
    %c0_i32 = arith.constant 0 : i32
    %c0_i32_0 = arith.constant 0 : i32
    %c0_i32_1 = arith.constant 0 : i32
    return %c0_i32, %c0_i32_0 : i32, i32
  }
  func.func @transform_6(%arg0: i32) -> (i32, i32) {
    %c0_i32 = arith.constant 0 : i32
    %c0_i32_0 = arith.constant 0 : i32
    %c0_i32_1 = arith.constant 0 : i32
    return %c0_i32, %c0_i32_0 : i32, i32
  }
  func.func @transform_7(%arg0: i32) -> (i32, i32) {
    %c0_i32 = arith.constant 0 : i32
    %c0_i32_0 = arith.constant 0 : i32
    %c0_i32_1 = arith.constant 0 : i32
    return %c0_i32, %c0_i32_0 : i32, i32
  }
  func.func @transform_8(%arg0: i32) -> (i32, i32) {
    %c0_i32 = arith.constant 0 : i32
    %c0_i32_0 = arith.constant 0 : i32
    %c0_i32_1 = arith.constant 0 : i32
    return %c0_i32, %c0_i32_0 : i32, i32
  }
  func.func @transform_9(%arg0: i32) -> (i32, i32, i32) {
    %c0_i32 = arith.constant 0 : i32
    %c0_i32_0 = arith.constant 0 : i32
    %c0_i32_1 = arith.constant 0 : i32
    return %arg0, %c0_i32, %c0_i32_0 : i32, i32, i32
  }
}

</mosaic_0001>

<llo_original>
// kernel: tpu_custom_call.1
$region0: #{tpu_custom_call.1}
  #allocation0 [shape = 'u32[]', space=smem, size = 0x4, offset = 0x4, fixed_abs, tag = 'smem constant byte address 0x4 - core index']
  #allocation1 [shape = 'u32[144,128]{1,0:T(1,128)}', space=vmem, size = 0x12000, scoped, tag = 'internal scratch']
  #allocation2 [shape = 'f32[64,128]{1,0:T(8,128)}', space=vmem, size = 0x8000, scoped, tag = 'scratch operand']
  #allocation3 [shape = 'f32[64,32]{1,0:T(8,128)}', space=vmem, size = 0x8000, scoped, tag = 'scratch operand']
  %s0 = inlined_call_operand.vmem [shape: f32[1,64,32], index: 0, kind: input, shape index: {}]
  %s1 = inlined_call_operand.vmem [shape: f32[32,128], index: 1, kind: input, shape index: {}]
  %s2 = inlined_call_operand.vmem [shape: f32[32,128], index: 2, kind: input, shape index: {}]
  %s3 = inlined_call_operand.vmem [shape: f32[1,128], index: 3, kind: input, shape index: {}]
  %s4 = inlined_call_operand.vmem [shape: f32[32,128], index: 4, kind: input, shape index: {}]
  %s5 = inlined_call_operand.hbm [shape: f32[32,128], index: 5, kind: input, shape index: {}]
  %s6 = inlined_call_operand.vmem [shape: f32[1,128], index: 6, kind: input, shape index: {}]
  %s7 = inlined_call_operand.hbm [shape: f32[32,128], index: 7, kind: input, shape index: {}]
  %s8 = inlined_call_operand.vmem [shape: f32[1,128], index: 8, kind: input, shape index: {}]
  %s9 = inlined_call_operand.hbm [shape: f32[1,64,128], index: 9, kind: output, shape index: {}]
  %s10 = sld [smem:[#allocation0]]
  $region54: #{tpu_custom_call.1} parent=0
    _
  %s12 = ssub.s32 1, %s10
  %s13 = scalar_select 0, %s12, %s10
  $region1: #{tpu_custom_call.1} parent=0
    #allocation4 [shape = 'u8[16384]{0}', space=vmem, size = 0x4000, scoped, tag = 'input window, operand 5, single buffered']
    #allocation5 [shape = 's32[1]{0}', space=sflag, size = 0x4, scoped, tag = 'scoped memory for tpu_custom_call.1']
    #allocation6 [shape = 's32[1]{0}', space=sflag, size = 0x4, scoped, tag = 'scoped memory for tpu_custom_call.1']
    #allocation7 [shape = 'u8[16384]{0}', space=vmem, size = 0x4000, scoped, tag = 'input window, operand 7, single buffered']
    #allocation8 [shape = 's32[1]{0}', space=sflag, size = 0x4, scoped, tag = 'scoped memory for tpu_custom_call.1']
    #allocation9 [shape = 'u8[32768]{0}', space=vmem, size = 0x8000, scoped, tag = 'output window, operand 0, single buffered']
    %14 = vsyncpa [#allocation5], 0
    %15 = vsyncpa [#allocation8], 0
    %16 = vsyncpa [#allocation6], 0
    // Predicated region
    $region2: #{tpu_custom_call.1} parent=1 // pred_check
      _
    $region3: #{tpu_custom_call.1} parent=1 // pred_check_branch
      %18 = sbr.rel (0) target = $region5
    $region4: #{tpu_custom_call.1} parent=1 // pred_region
      _
    $region5: #{tpu_custom_call.1} parent=1 // pred_fallthru
      _
    // Predicated region
    $region6: #{tpu_custom_call.1} parent=1 // pred_check
      _
    $region7: #{tpu_custom_call.1} parent=1 // pred_check_branch
      %20 = sbr.rel (0) target = $region9
    $region8: #{tpu_custom_call.1} parent=1 // pred_region
      _
    $region9: #{tpu_custom_call.1} parent=1 // pred_fallthru
      _
    // Predicated region
    $region10: #{tpu_custom_call.1} parent=1 // pred_check
      _
    $region11: #{tpu_custom_call.1} parent=1 // pred_check_branch
      %22 = sbr.rel (0) target = $region13
    $region12: #{tpu_custom_call.1} parent=1 // pred_region
      _
    $region13: #{tpu_custom_call.1} parent=1 // pred_fallthru
      _
    // Predicated region
    $region14: #{tpu_custom_call.1} parent=1 // pred_check
      _
    $region15: #{tpu_custom_call.1} parent=1 // pred_check_branch
      %24 = sbr.rel (0) target = $region17
    $region16: #{tpu_custom_call.1} parent=1 // pred_region
      _
    $region17: #{tpu_custom_call.1} parent=1 // pred_fallthru
      _
    // Predicated region
    $region18: #{tpu_custom_call.1} parent=1 // pred_check
      _
    $region19: #{tpu_custom_call.1} parent=1 // pred_check_branch
      %26 = sbr.rel (0) target = $region21
    $region20: #{tpu_custom_call.1} parent=1 // pred_region
      _
    $region21: #{tpu_custom_call.1} parent=1 // pred_fallthru
      _
    // Predicated region
    $region22: #{tpu_custom_call.1} parent=1 // pred_check
      _
    $region23: #{tpu_custom_call.1} parent=1 // pred_check_branch
      %28 = sbr.rel (0) target = $region25
    $region24: #{tpu_custom_call.1} parent=1 // pred_region
      %s30 = ssub.s32 512, 512
      %31 = vsyncadd [#allocation5], %s30
      %s32 = sshll.u32 [#allocation4], 4
      %s33 = int_to_ptr.vmem [resolvable:$true] %s32
      %38 = dma.hbm_to_vmem [thread:$0]  %s5, 512, %s33, [#allocation5], 128, 128, 8
    $region25: #{tpu_custom_call.1} parent=1 // pred_fallthru
      _
    // Predicated region
    $region26: #{tpu_custom_call.1} parent=1 // pred_check
      _
    $region27: #{tpu_custom_call.1} parent=1 // pred_check_branch
      %40 = sbr.rel (0) target = $region29
    $region28: #{tpu_custom_call.1} parent=1 // pred_region
      _
    $region29: #{tpu_custom_call.1} parent=1 // pred_fallthru
      _
    // Predicated region
    $region30: #{tpu_custom_call.1} parent=1 // pred_check
      _
    $region31: #{tpu_custom_call.1} parent=1 // pred_check_branch
      %42 = sbr.rel (0) target = $region33
    $region32: #{tpu_custom_call.1} parent=1 // pred_region
      %s44 = ssub.s32 512, 512
      %45 = vsyncadd [#allocation8], %s44
      %s46 = sshll.u32 [#allocation7], 4
      %s47 = int_to_ptr.vmem [resolvable:$true] %s46
      %52 = dma.hbm_to_vmem [thread:$0]  %s7, 512, %s47, [#allocation8], 128, 128, 8
    $region33: #{tpu_custom_call.1} parent=1 // pred_fallthru
      _
    // Predicated region
    $region34: #{tpu_custom_call.1} parent=1 // pred_check
      _
    $region35: #{tpu_custom_call.1} parent=1 // pred_check_branch
      %54 = sbr.rel (0) target = $region37
    $region36: #{tpu_custom_call.1} parent=1 // pred_region
      _
    $region37: #{tpu_custom_call.1} parent=1 // pred_fallthru
      _
    // Predicated region
    $region38: #{tpu_custom_call.1} parent=1 // pred_check
      _
    $region39: #{tpu_custom_call.1} parent=1 // pred_check_branch
      %56 = sbr.rel (0) target = $region41
    $region40: #{tpu_custom_call.1} parent=1 // pred_region
      %57 = dma.done [#allocation5], 512
    $region41: #{tpu_custom_call.1} parent=1 // pred_fallthru
      _
    // Predicated region
    $region42: #{tpu_custom_call.1} parent=1 // pred_check
      _
    $region43: #{tpu_custom_call.1} parent=1 // pred_check_branch
      %59 = sbr.rel (0) target = $region45
    $region44: #{tpu_custom_call.1} parent=1 // pred_region
      %60 = dma.done [#allocation8], 512
    $region45: #{tpu_custom_call.1} parent=1 // pred_fallthru
      _
    %v61 = vlaneseq
    %v62 = vand.u32 %v61, 127
    %vm63 = vcmp.ge.s32.totalorder %v62, 64
    %vm64 = vcmp.lt.s32.totalorder %v62, 96
    %vm65 = vmand %vm63, %vm64
    %v66 = vsel %vm65, 1.0, 0.5
    %v67 = vsel %vm65, 0.0, 0.5
    %v68 = vld [vmem:[%s1] sm:$0xff]
    %v69 = vld [vmem:[%s1 + $0x8] sm:$0xff]
    %v70 = vld [vmem:[%s1 + $0x10] sm:$0xff]
    %v71 = vld [vmem:[%s1 + $0x18] sm:$0xff]
    %v72 = vld [vmem:[%s2] sm:$0xff]
    %v73 = vld [vmem:[%s2 + $0x8] sm:$0xff]
    %v74 = vld [vmem:[%s2 + $0x10] sm:$0xff]
    %v75 = vld [vmem:[%s2 + $0x18] sm:$0xff]
    %v76 = vld [vmem:[%s3] sm:$0x1]
    %v77 = vld [vmem:[%s0] sm:$0xff]
    %v78 = vld [vmem:[%s0 + $0x8] sm:$0xff]
    %v79 = vld [vmem:[%s0 + $0x10] sm:$0xff]
    %v80 = vld [vmem:[%s0 + $0x18] sm:$0xff]
    %v81 = vld [vmem:[%s0 + $0x20] sm:$0xff]
    %v82 = vld [vmem:[%s0 + $0x28] sm:$0xff]
    %v83 = vld [vmem:[%s0 + $0x30] sm:$0xff]
    %v84 = vld [vmem:[%s0 + $0x38] sm:$0xff]
    %v86 = vlaneseq
    %v87 = vshrl.u32 %v86, 7
    %v88 = vsub.s32 0, %v87
    %v89 = vrot.slane %v76, %v88
    %vm91 = vcmask 261120
    %v93 = vsel %vm91, %v77, 0
    %v96 = vsel %vm91, %v78, 0
    %v99 = vsel %vm91, %v79, 0
    %v102 = vsel %vm91, %v80, 0
    %v105 = vsel %vm91, %v81, 0
    %v108 = vsel %vm91, %v82, 0
    %v111 = vsel %vm91, %v83, 0
    %v114 = vsel %vm91, %v84, 0
    %116 = vmatprep.subr.mxu0 0.0
    %117 = vmatpush1.msra.mxu0 %v68
    %118 = vmatprep.subr.mxu0 0.0
    %119 = vmatpush1.msra.mxu0 %v69
    %120 = vmatprep.subr.mxu0 0.0
    %121 = vmatpush1.msra.mxu0 %v70
    %122 = vmatprep.subr.mxu0 0.0
    %123 = vmatpush1.msra.mxu0 %v71
    %124 = vmatprep.subr.mxu0 0.0
    %125 = vmatpush1.msra.mxu0 0.0
    %126 = vmatprep.subr.mxu0 0.0
    %127 = vmatpush1.msra.mxu0 0.0
    %128 = vmatprep.subr.mxu0 0.0
    %129 = vmatpush1.msra.mxu0 0.0
    %130 = vmatprep.subr.mxu0 0.0
    %131 = vmatpush1.msra.mxu0 0.0
    %132 = vmatprep.subr.mxu0 0.0
    %133 = vmatpush1.msra.mxu0 0.0
    %134 = vmatprep.subr.mxu0 0.0
    %135 = vmatpush1.msra.mxu0 0.0
    %136 = vmatprep.subr.mxu0 0.0
    %137 = vmatpush1.msra.mxu0 0.0
    %138 = vmatprep.subr.mxu0 0.0
    %139 = vmatpush1.msra.mxu0 0.0
    %140 = vmatprep.subr.mxu0 0.0
    %141 = vmatpush1.msra.mxu0 0.0
    %142 = vmatprep.subr.mxu0 0.0
    %143 = vmatpush1.msra.mxu0 0.0
    %144 = vmatprep.subr.mxu0 0.0
    %145 = vmatpush1.msra.mxu0 0.0
    %146 = vmatprep.subr.mxu0 0.0
    %147 = vmatpush1.msra.mxu0 0.0
    %148 = vmatprep.subr.mxu0 0.0
    %149 = vmatpush1.msra.mxu0 0.0
    %150 = vmatprep.subr.mxu0 0.0
    %151 = vmatpush1.msra.mxu0 0.0
    %152 = vmatprep.subr.mxu0 0.0
    %153 = vmatpush1.msra.mxu0 0.0
    %154 = vmatprep.subr.mxu0 0.0
    %155 = vmatpush1.msra.mxu0 0.0
    %156 = vmatprep.subr.mxu0 0.0
    %157 = vmatpush1.msra.mxu0 0.0
    %158 = vmatprep.subr.mxu0 0.0
    %159 = vmatpush1.msra.mxu0 0.0
    %160 = vmatprep.subr.mxu0 0.0
    %161 = vmatpush1.msra.mxu0 0.0
    %162 = vmatprep.subr.mxu0 0.0
    %163 = vmatpush1.msra.mxu0 0.0
    %164 = vmatprep.subr.mxu0 0.0
    %165 = vmatpush1.msra.mxu0 0.0
    %166 = vmatprep.subr.mxu0 0.0
    %167 = vmatpush1.msra.mxu0 0.0
    %168 = vmatprep.subr.mxu0 0.0
    %169 = vmatpush1.msra.mxu0 0.0
    %170 = vmatprep.subr.mxu0 0.0
    %171 = vmatpush1.msra.mxu0 0.0
    %172 = vmatprep.subr.mxu0 0.0
    %173 = vmatpush1.msra.mxu0 0.0
    %174 = vmatprep.subr.mxu0 0.0
    %175 = vmatpush1.msra.mxu0 0.0
    %176 = vmatprep.subr.mxu0 0.0
    %177 = vmatpush1.msra.mxu0 0.0
    %178 = vmatprep.subr.mxu0 0.0
    %179 = vmatpush1.msra.mxu0 0.0
    %180 = vmatprep.mubr.f32.mxu0 0.0
    %181 = vmatmul.mubr.f32.gmra.mrb[0].mxu0 %v93
    %v182 = vpop.f32.mrb[0].mxu0
    %v183 = vadd.f32 %v89, %v182
    %v184 = vpop.f32.mrb[0].mxu0
    %185 = vmatprep.mubr.f32.mxu0 0.0
    %186 = vmatmul.mubr.f32.gmra.mrb[0].mxu0 %v96
    %v187 = vpop.f32.mrb[0].mxu0
    %v188 = vadd.f32 %v89, %v187
    %v189 = vpop.f32.mrb[0].mxu0
    %190 = vmatprep.mubr.f32.mxu0 0.0
    %191 = vmatmul.mubr.f32.gmra.mrb[0].mxu0 %v99
    %v192 = vpop.f32.mrb[0].mxu0
    %v193 = vadd.f32 %v89, %v192
    %v194 = vpop.f32.mrb[0].mxu0
    %195 = vmatprep.mubr.f32.mxu0 0.0
    %196 = vmatmul.mubr.f32.gmra.mrb[0].mxu0 %v102
    %v197 = vpop.f32.mrb[0].mxu0
    %v198 = vadd.f32 %v89, %v197
    %v199 = vpop.f32.mrb[0].mxu0
    %200 = vmatprep.mubr.f32.mxu0 0.0
    %201 = vmatmul.mubr.f32.gmra.mrb[0].mxu0 %v105
    %v202 = vpop.f32.mrb[0].mxu0
    %v203 = vadd.f32 %v89, %v202
    %v204 = vpop.f32.mrb[0].mxu0
    %205 = vmatprep.mubr.f32.mxu0 0.0
    %206 = vmatmul.mubr.f32.gmra.mrb[0].mxu0 %v108
    %v207 = vpop.f32.mrb[0].mxu0
    %v208 = vadd.f32 %v89, %v207
    %v209 = vpop.f32.mrb[0].mxu0
    %210 = vmatprep.mubr.f32.mxu0 0.0
    %211 = vmatmul.mubr.f32.gmra.mrb[0].mxu0 %v111
    %v212 = vpop.f32.mrb[0].mxu0
    %v213 = vadd.f32 %v89, %v212
    %v214 = vpop.f32.mrb[0].mxu0
    %215 = vmatprep.mubr.f32.mxu0 0.0
    %216 = vmatmul.mubr.f32.gmra.mrb[0].mxu0 %v114
    %v217 = vpop.f32.mrb[0].mxu0
    %v218 = vadd.f32 %v89, %v217
    %v219 = vpop.f32.mrb[0].mxu0
    %220 = vdwg.mxu0
    %221 = vst [vmem:[#allocation2] sm:$0xff] %v183
    %222 = vst [vmem:[#allocation2 + $0x8] sm:$0xff] %v188
    %223 = vst [vmem:[#allocation2 + $0x10] sm:$0xff] %v193
    %224 = vst [vmem:[#allocation2 + $0x18] sm:$0xff] %v198
    %225 = vst [vmem:[#allocation2 + $0x20] sm:$0xff] %v203
    %226 = vst [vmem:[#allocation2 + $0x28] sm:$0xff] %v208
    %227 = vst [vmem:[#allocation2 + $0x30] sm:$0xff] %v213
    %228 = vst [vmem:[#allocation2 + $0x38] sm:$0xff] %v218
    %v229 = vld [vmem:[#allocation2] sm:$0xff]
    %v231 = vsel %vm91, 0.0, 0
    %233 = vmatprep.subr.mxu0 0.0
    %234 = vmatpush1.msra.mxu0 %v72
    %235 = vmatprep.subr.mxu0 0.0
    %236 = vmatpush1.msra.mxu0 %v73
    %237 = vmatprep.subr.mxu0 0.0
    %238 = vmatpush1.msra.mxu0 %v74
    %239 = vmatprep.subr.mxu0 0.0
    %240 = vmatpush1.msra.mxu0 %v75
    %241 = vmatprep.subr.mxu0 0.0
    %242 = vmatpush1.msra.mxu0 0.0
    %243 = vmatprep.subr.mxu0 0.0
    %244 = vmatpush1.msra.mxu0 0.0
    %245 = vmatprep.subr.mxu0 0.0
    %246 = vmatpush1.msra.mxu0 0.0
    %247 = vmatprep.subr.mxu0 0.0
    %248 = vmatpush1.msra.mxu0 0.0
    %249 = vmatprep.subr.mxu0 0.0
    %250 = vmatpush1.msra.mxu0 0.0
    %251 = vmatprep.subr.mxu0 0.0
    %252 = vmatpush1.msra.mxu0 0.0
    %253 = vmatprep.subr.mxu0 0.0
    %254 = vmatpush1.msra.mxu0 0.0
    %255 = vmatprep.subr.mxu0 0.0
    %256 = vmatpush1.msra.mxu0 0.0
    %257 = vmatprep.subr.mxu0 0.0
    %258 = vmatpush1.msra.mxu0 0.0
    %259 = vmatprep.subr.mxu0 0.0
    %260 = vmatpush1.msra.mxu0 0.0
    %261 = vmatprep.subr.mxu0 0.0
    %262 = vmatpush1.msra.mxu0 0.0
    %263 = vmatprep.subr.mxu0 0.0
    %264 = vmatpush1.msra.mxu0 0.0
    %265 = vmatprep.subr.mxu0 0.0
    %266 = vmatpush1.msra.mxu0 0.0
    %267 = vmatprep.subr.mxu0 0.0
    %268 = vmatpush1.msra.mxu0 0.0
    %269 = vmatprep.subr.mxu0 0.0
    %270 = vmatpush1.msra.mxu0 0.0
    %271 = vmatprep.subr.mxu0 0.0
    %272 = vmatpush1.msra.mxu0 0.0
    %273 = vmatprep.subr.mxu0 0.0
    %274 = vmatpush1.msra.mxu0 0.0
    %275 = vmatprep.subr.mxu0 0.0
    %276 = vmatpush1.msra.mxu0 0.0
    %277 = vmatprep.subr.mxu0 0.0
    %278 = vmatpush1.msra.mxu0 0.0
    %279 = vmatprep.subr.mxu0 0.0
    %280 = vmatpush1.msra.mxu0 0.0
    %281 = vmatprep.subr.mxu0 0.0
    %282 = vmatpush1.msra.mxu0 0.0
    %283 = vmatprep.subr.mxu0 0.0
    %284 = vmatpush1.msra.mxu0 0.0
    %285 = vmatprep.subr.mxu0 0.0
    %286 = vmatpush1.msra.mxu0 0.0
    %287 = vmatprep.subr.mxu0 0.0
    %288 = vmatpush1.msra.mxu0 0.0
    %289 = vmatprep.subr.mxu0 0.0
    %290 = vmatpush1.msra.mxu0 0.0
    %291 = vmatprep.subr.mxu0 0.0
    %292 = vmatpush1.msra.mxu0 0.0
    %293 = vmatprep.subr.mxu0 0.0
    %294 = vmatpush1.msra.mxu0 0.0
    %295 = vmatprep.subr.mxu0 0.0
    %296 = vmatpush1.msra.mxu0 0.0
    %297 = vmatprep.mubr.f32.mxu0 0.0
    %298 = vmatmul.mubr.f32.gmra.mrb[0].mxu0 %v231
    %v299 = vpop.f32.mrb[0].mxu0
    %v300 = vadd.f32 0.0, %v299
    %v301 = vpop.f32.mrb[0].mxu0
    %302 = vdwg.mxu0
    %v303 = vadd.f32 %v229, %v300
    %v304 = vmul.f32 %v303, %v66
    %v305 = vtanh.pop %v304
    %v306 = vmul.f32 %v305, %v66
    %v307 = vadd.f32 %v306, %v67
    %v308 = vmul.f32 %v307, 0.0
    %310 = vrot.lane.b32.xlu0 %v307, 64
    %v311 = vpop.permute.xlu0 %310
    %v313 = vmul.f32 %v307, %v311
    %315 = vrot.lane.b32.xlu0 %v313, 32
    %v316 = vpop.permute.xlu0 %315
    %v318 = vadd.f32 %v308, %v316
    %v319 = vtanh.pop %v318
    %321 = vrot.lane.b32.xlu0 %v319, 64
    %v322 = vpop.permute.xlu0 %321
    %v324 = vmul.f32 %v307, %v322
    %326 = vrot.lane.b32.xlu0 %v324, 32
    %v327 = vpop.permute.xlu0 %326
    %329 = vst.msk [vmem:[#allocation3] sm:$0xff] %vm91, %v327
    %s330 = scalar_lea.vmem [#allocation2], 8
    %v331 = vld [vmem:[%s330] sm:$0xff]
    %v332 = vsel %vm91, %v327, 0
    %334 = vmatprep.subr.mxu0 0.0
    %335 = vmatpush1.msra.mxu0 %v72
    %336 = vmatprep.subr.mxu0 0.0
    %337 = vmatpush1.msra.mxu0 %v73
    %338 = vmatprep.subr.mxu0 0.0
    %339 = vmatpush1.msra.mxu0 %v74
    %340 = vmatprep.subr.mxu0 0.0
    %341 = vmatpush1.msra.mxu0 %v75
    %342 = vmatprep.subr.mxu0 0.0
    %343 = vmatpush1.msra.mxu0 0.0
    %344 = vmatprep.subr.mxu0 0.0
    %345 = vmatpush1.msra.mxu0 0.0
    %346 = vmatprep.subr.mxu0 0.0
    %347 = vmatpush1.msra.mxu0 0.0
    %348 = vmatprep.subr.mxu0 0.0
    %349 = vmatpush1.msra.mxu0 0.0
    %350 = vmatprep.subr.mxu0 0.0
    %351 = vmatpush1.msra.mxu0 0.0
    %352 = vmatprep.subr.mxu0 0.0
    %353 = vmatpush1.msra.mxu0 0.0
    %354 = vmatprep.subr.mxu0 0.0
    %355 = vmatpush1.msra.mxu0 0.0
    %356 = vmatprep.subr.mxu0 0.0
    %357 = vmatpush1.msra.mxu0 0.0
    %358 = vmatprep.subr.mxu0 0.0
    %359 = vmatpush1.msra.mxu0 0.0
    %360 = vmatprep.subr.mxu0 0.0
    %361 = vmatpush1.msra.mxu0 0.0
    %362 = vmatprep.subr.mxu0 0.0
    %363 = vmatpush1.msra.mxu0 0.0
    %364 = vmatprep.subr.mxu0 0.0
    %365 = vmatpush1.msra.mxu0 0.0
    %366 = vmatprep.subr.mxu0 0.0
    %367 = vmatpush1.msra.mxu0 0.0
    %368 = vmatprep.subr.mxu0 0.0
    %369 = vmatpush1.msra.mxu0 0.0
    %370 = vmatprep.subr.mxu0 0.0
    %371 = vmatpush1.msra.mxu0 0.0
    %372 = vmatprep.subr.mxu0 0.0
    %373 = vmatpush1.msra.mxu0 0.0
    %374 = vmatprep.subr.mxu0 0.0
    %375 = vmatpush1.msra.mxu0 0.0
    %376 = vmatprep.subr.mxu0 0.0
    %377 = vmatpush1.msra.mxu0 0.0
    %378 = vmatprep.subr.mxu0 0.0
    %379 = vmatpush1.msra.mxu0 0.0
    %380 = vmatprep.subr.mxu0 0.0
    %381 = vmatpush1.msra.mxu0 0.0
    %382 = vmatprep.subr.mxu0 0.0
    %383 = vmatpush1.msra.mxu0 0.0
    %384 = vmatprep.subr.mxu0 0.0
    %385 = vmatpush1.msra.mxu0 0.0
    %386 = vmatprep.subr.mxu0 0.0
    %387 = vmatpush1.msra.mxu0 0.0
    %388 = vmatprep.subr.mxu0 0.0
    %389 = vmatpush1.msra.mxu0 0.0
    %390 = vmatprep.subr.mxu0 0.0
    %391 = vmatpush1.msra.mxu0 0.0
    %392 = vmatprep.subr.mxu0 0.0
    %393 = vmatpush1.msra.mxu0 0.0
    %394 = vmatprep.subr.mxu0 0.0
    %395 = vmatpush1.msra.mxu0 0.0
    %396 = vmatprep.subr.mxu0 0.0
    %397 = vmatpush1.msra.mxu0 0.0
    %398 = vmatprep.mubr.f32.mxu0 0.0
    %399 = vmatmul.mubr.f32.gmra.mrb[0].mxu0 %v332
    %v400 = vpop.f32.mrb[0].mxu0
    %v401 = vadd.f32 0.0, %v400
    %v402 = vpop.f32.mrb[0].mxu0
    %403 = vdwg.mxu0
    %v404 = vadd.f32 %v331, %v401
    %v405 = vmul.f32 %v404, %v66
    %v406 = vtanh.pop %v405
    %v407 = vmul.f32 %v406, %v66
    %v408 = vadd.f32 %v407, %v67
    %v409 = vmul.f32 %v408, %v318
    %411 = vrot.lane.b32.xlu0 %v408, 64
    %v412 = vpop.permute.xlu0 %411
    %v414 = vmul.f32 %v408, %v412
    %416 = vrot.lane.b32.xlu0 %v414, 32
    %v417 = vpop.permute.xlu0 %416
    %v419 = vadd.f32 %v409, %v417
    %v420 = vtanh.pop %v419
    %422 = vrot.lane.b32.xlu0 %v420, 64
    %v423 = vpop.permute.xlu0 %422
    %v425 = vmul.f32 %v408, %v423
    %427 = vrot.lane.b32.xlu0 %v425, 32
    %v428 = vpop.permute.xlu0 %427
    %s430 = scalar_lea.vmem [#allocation3], 8
    %431 = vst.msk [vmem:[%s430] sm:$0xff] %vm91, %v428
    %s432 = scalar_lea.vmem [#allocation2], 16
    %v433 = vld [vmem:[%s432] sm:$0xff]
    %v434 = vsel %vm91, %v428, 0
    %436 = vmatprep.subr.mxu0 0.0
    %437 = vmatpush1.msra.mxu0 %v72
    %438 = vmatprep.subr.mxu0 0.0
    %439 = vmatpush1.msra.mxu0 %v73
    %440 = vmatprep.subr.mxu0 0.0
    %441 = vmatpush1.msra.mxu0 %v74
    %442 = vmatprep.subr.mxu0 0.0
    %443 = vmatpush1.msra.mxu0 %v75
    %444 = vmatprep.subr.mxu0 0.0
    %445 = vmatpush1.msra.mxu0 0.0
    %446 = vmatprep.subr.mxu0 0.0
    %447 = vmatpush1.msra.mxu0 0.0
    %448 = vmatprep.subr.mxu0 0.0
    %449 = vmatpush1.msra.mxu0 0.0
    %450 = vmatprep.subr.mxu0 0.0
    %451 = vmatpush1.msra.mxu0 0.0
    %452 = vmatprep.subr.mxu0 0.0
    %453 = vmatpush1.msra.mxu0 0.0
    %454 = vmatprep.subr.mxu0 0.0
    %455 = vmatpush1.msra.mxu0 0.0
    %456 = vmatprep.subr.mxu0 0.0
    %457 = vmatpush1.msra.mxu0 0.0
    %458 = vmatprep.subr.mxu0 0.0
    %459 = vmatpush1.msra.mxu0 0.0
    %460 = vmatprep.subr.mxu0 0.0
    %461 = vmatpush1.msra.mxu0 0.0
    %462 = vmatprep.subr.mxu0 0.0
    %463 = vmatpush1.msra.mxu0 0.0
    %464 = vmatprep.subr.mxu0 0.0
    %465 = vmatpush1.msra.mxu0 0.0
    %466 = vmatprep.subr.mxu0 0.0
    %467 = vmatpush1.msra.mxu0 0.0
    %468 = vmatprep.subr.mxu0 0.0
    %469 = vmatpush1.msra.mxu0 0.0
    %470 = vmatprep.subr.mxu0 0.0
    %471 = vmatpush1.msra.mxu0 0.0
    %472 = vmatprep.subr.mxu0 0.0
    %473 = vmatpush1.msra.mxu0 0.0
    %474 = vmatprep.subr.mxu0 0.0
    %475 = vmatpush1.msra.mxu0 0.0
    %476 = vmatprep.subr.mxu0 0.0
    %477 = vmatpush1.msra.mxu0 0.0
    %478 = vmatprep.subr.mxu0 0.0
    %479 = vmatpush1.msra.mxu0 0.0
    %480 = vmatprep.subr.mxu0 0.0
    %481 = vmatpush1.msra.mxu0 0.0
    %482 = vmatprep.subr.mxu0 0.0
    %483 = vmatpush1.msra.mxu0 0.0
    %484 = vmatprep.subr.mxu0 0.0
    %485 = vmatpush1.msra.mxu0 0.0
    %486 = vmatprep.subr.mxu0 0.0
    %487 = vmatpush1.msra.mxu0 0.0
    %488 = vmatprep.subr.mxu0 0.0
    %489 = vmatpush1.msra.mxu0 0.0
    %490 = vmatprep.subr.mxu0 0.0
    %491 = vmatpush1.msra.mxu0 0.0
    %492 = vmatprep.subr.mxu0 0.0
    %493 = vmatpush1.msra.mxu0 0.0
    %494 = vmatprep.subr.mxu0 0.0
    %495 = vmatpush1.msra.mxu0 0.0
    %496 = vmatprep.subr.mxu0 0.0
    %497 = vmatpush1.msra.mxu0 0.0
    %498 = vmatprep.subr.mxu0 0.0
    %499 = vmatpush1.msra.mxu0 0.0
    %500 = vmatprep.mubr.f32.mxu0 0.0
    %501 = vmatmul.mubr.f32.gmra.mrb[0].mxu0 %v434
    %v502 = vpop.f32.mrb[0].mxu0
    %v503 = vadd.f32 0.0, %v502
    %v504 = vpop.f32.mrb[0].mxu0
    %505 = vdwg.mxu0
    %v506 = vadd.f32 %v433, %v503
    %v507 = vmul.f32 %v506, %v66
    %v508 = vtanh.pop %v507
    %v509 = vmul.f32 %v508, %v66
    %v510 = vadd.f32 %v509, %v67
    %v511 = vmul.f32 %v510, %v419
    %513 = vrot.lane.b32.xlu0 %v510, 64
    %v514 = vpop.permute.xlu0 %513
    %v516 = vmul.f32 %v510, %v514
    %518 = vrot.lane.b32.xlu0 %v516, 32
    %v519 = vpop.permute.xlu0 %518
    %v521 = vadd.f32 %v511, %v519
    %v522 = vtanh.pop %v521
    %524 = vrot.lane.b32.xlu0 %v522, 64
    %v525 = vpop.permute.xlu0 %524
    %v527 = vmul.f32 %v510, %v525
    %529 = vrot.lane.b32.xlu0 %v527, 32
    %v530 = vpop.permute.xlu0 %529
    %s532 = scalar_lea.vmem [#allocation3], 16
    %533 = vst.msk [vmem:[%s532] sm:$0xff] %vm91, %v530
    %s534 = scalar_lea.vmem [#allocation2], 24
    %v535 = vld [vmem:[%s534] sm:$0xff]
    %v536 = vsel %vm91, %v530, 0
    %538 = vmatprep.subr.mxu0 0.0
    %539 = vmatpush1.msra.mxu0 %v72
    %540 = vmatprep.subr.mxu0 0.0
    %541 = vmatpush1.msra.mxu0 %v73
    %542 = vmatprep.subr.mxu0 0.0
    %543 = vmatpush1.msra.mxu0 %v74
    %544 = vmatprep.subr.mxu0 0.0
    %545 = vmatpush1.msra.mxu0 %v75
    %546 = vmatprep.subr.mxu0 0.0
    %547 = vmatpush1.msra.mxu0 0.0
    %548 = vmatprep.subr.mxu0 0.0
    %549 = vmatpush1.msra.mxu0 0.0
    %550 = vmatprep.subr.mxu0 0.0
    %551 = vmatpush1.msra.mxu0 0.0
    %552 = vmatprep.subr.mxu0 0.0
    %553 = vmatpush1.msra.mxu0 0.0
    %554 = vmatprep.subr.mxu0 0.0
    %555 = vmatpush1.msra.mxu0 0.0
    %556 = vmatprep.subr.mxu0 0.0
    %557 = vmatpush1.msra.mxu0 0.0
    %558 = vmatprep.subr.mxu0 0.0
    %559 = vmatpush1.msra.mxu0 0.0
    %560 = vmatprep.subr.mxu0 0.0
    %561 = vmatpush1.msra.mxu0 0.0
    %562 = vmatprep.subr.mxu0 0.0
    %563 = vmatpush1.msra.mxu0 0.0
    %564 = vmatprep.subr.mxu0 0.0
    %565 = vmatpush1.msra.mxu0 0.0
    %566 = vmatprep.subr.mxu0 0.0
    %567 = vmatpush1.msra.mxu0 0.0
    %568 = vmatprep.subr.mxu0 0.0
    %569 = vmatpush1.msra.mxu0 0.0
    %570 = vmatprep.subr.mxu0 0.0
    %571 = vmatpush1.msra.mxu0 0.0
    %572 = vmatprep.subr.mxu0 0.0
    %573 = vmatpush1.msra.mxu0 0.0
    %574 = vmatprep.subr.mxu0 0.0
    %575 = vmatpush1.msra.mxu0 0.0
    %576 = vmatprep.subr.mxu0 0.0
    %577 = vmatpush1.msra.mxu0 0.0
    %578 = vmatprep.subr.mxu0 0.0
    %579 = vmatpush1.msra.mxu0 0.0
    %580 = vmatprep.subr.mxu0 0.0
    %581 = vmatpush1.msra.mxu0 0.0
    %582 = vmatprep.subr.mxu0 0.0
    %583 = vmatpush1.msra.mxu0 0.0
    %584 = vmatprep.subr.mxu0 0.0
    %585 = vmatpush1.msra.mxu0 0.0
    %586 = vmatprep.subr.mxu0 0.0
    %587 = vmatpush1.msra.mxu0 0.0
    %588 = vmatprep.subr.mxu0 0.0
    %589 = vmatpush1.msra.mxu0 0.0
    %590 = vmatprep.subr.mxu0 0.0
    %591 = vmatpush1.msra.mxu0 0.0
    %592 = vmatprep.subr.mxu0 0.0
    %593 = vmatpush1.msra.mxu0 0.0
    %594 = vmatprep.subr.mxu0 0.0
    %595 = vmatpush1.msra.mxu0 0.0
    %596 = vmatprep.subr.mxu0 0.0
    %597 = vmatpush1.msra.mxu0 0.0
    %598 = vmatprep.subr.mxu0 0.0
    %599 = vmatpush1.msra.mxu0 0.0
    %600 = vmatprep.subr.mxu0 0.0
    %601 = vmatpush1.msra.mxu0 0.0
    %602 = vmatprep.mubr.f32.mxu0 0.0
    %603 = vmatmul.mubr.f32.gmra.mrb[0].mxu0 %v536
    %v604 = vpop.f32.mrb[0].mxu0
    %v605 = vadd.f32 0.0, %v604
    %v606 = vpop.f32.mrb[0].mxu0
    %607 = vdwg.mxu0
    %v608 = vadd.f32 %v535, %v605
    %v609 = vmul.f32 %v608, %v66
    %v610 = vtanh.pop %v609
    %v611 = vmul.f32 %v610, %v66
    %v612 = vadd.f32 %v611, %v67
    %v613 = vmul.f32 %v612, %v521
    %615 = vrot.lane.b32.xlu0 %v612, 64
    %v616 = vpop.permute.xlu0 %615
    %v618 = vmul.f32 %v612, %v616
    %620 = vrot.lane.b32.xlu0 %v618, 32
    %v621 = vpop.permute.xlu0 %620
    %v623 = vadd.f32 %v613, %v621
    %v624 = vtanh.pop %v623
    %626 = vrot.lane.b32.xlu0 %v624, 64
    %v627 = vpop.permute.xlu0 %626
    %v629 = vmul.f32 %v612, %v627
    %631 = vrot.lane.b32.xlu0 %v629, 32
    %v632 = vpop.permute.xlu0 %631
    %s634 = scalar_lea.vmem [#allocation3], 24
    %635 = vst.msk [vmem:[%s634] sm:$0xff] %vm91, %v632
    %s636 = scalar_lea.vmem [#allocation2], 32
    %v637 = vld [vmem:[%s636] sm:$0xff]
    %v638 = vsel %vm91, %v632, 0
    %640 = vmatprep.subr.mxu0 0.0
    %641 = vmatpush1.msra.mxu0 %v72
    %642 = vmatprep.subr.mxu0 0.0
    %643 = vmatpush1.msra.mxu0 %v73
    %644 = vmatprep.subr.mxu0 0.0
    %645 = vmatpush1.msra.mxu0 %v74
    %646 = vmatprep.subr.mxu0 0.0
    %647 = vmatpush1.msra.mxu0 %v75
    %648 = vmatprep.subr.mxu0 0.0
    %649 = vmatpush1.msra.mxu0 0.0
    %650 = vmatprep.subr.mxu0 0.0
    %651 = vmatpush1.msra.mxu0 0.0
    %652 = vmatprep.subr.mxu0 0.0
    %653 = vmatpush1.msra.mxu0 0.0
    %654 = vmatprep.subr.mxu0 0.0
    %655 = vmatpush1.msra.mxu0 0.0
    %656 = vmatprep.subr.mxu0 0.0
    %657 = vmatpush1.msra.mxu0 0.0
    %658 = vmatprep.subr.mxu0 0.0
    %659 = vmatpush1.msra.mxu0 0.0
    %660 = vmatprep.subr.mxu0 0.0
    %661 = vmatpush1.msra.mxu0 0.0
    %662 = vmatprep.subr.mxu0 0.0
    %663 = vmatpush1.msra.mxu0 0.0
    %664 = vmatprep.subr.mxu0 0.0
    %665 = vmatpush1.msra.mxu0 0.0
    %666 = vmatprep.subr.mxu0 0.0
    %667 = vmatpush1.msra.mxu0 0.0
    %668 = vmatprep.subr.mxu0 0.0
    %669 = vmatpush1.msra.mxu0 0.0
    %670 = vmatprep.subr.mxu0 0.0
    %671 = vmatpush1.msra.mxu0 0.0
    %672 = vmatprep.subr.mxu0 0.0
    %673 = vmatpush1.msra.mxu0 0.0
    %674 = vmatprep.subr.mxu0 0.0
    %675 = vmatpush1.msra.mxu0 0.0
    %676 = vmatprep.subr.mxu0 0.0
    %677 = vmatpush1.msra.mxu0 0.0
    %678 = vmatprep.subr.mxu0 0.0
    %679 = vmatpush1.msra.mxu0 0.0
    %680 = vmatprep.subr.mxu0 0.0
    %681 = vmatpush1.msra.mxu0 0.0
    %682 = vmatprep.subr.mxu0 0.0
    %683 = vmatpush1.msra.mxu0 0.0
    %684 = vmatprep.subr.mxu0 0.0
    %685 = vmatpush1.msra.mxu0 0.0
    %686 = vmatprep.subr.mxu0 0.0
    %687 = vmatpush1.msra.mxu0 0.0
    %688 = vmatprep.subr.mxu0 0.0
    %689 = vmatpush1.msra.mxu0 0.0
    %690 = vmatprep.subr.mxu0 0.0
    %691 = vmatpush1.msra.mxu0 0.0
    %692 = vmatprep.subr.mxu0 0.0
    %693 = vmatpush1.msra.mxu0 0.0
    %694 = vmatprep.subr.mxu0 0.0
    %695 = vmatpush1.msra.mxu0 0.0
    %696 = vmatprep.subr.mxu0 0.0
    %697 = vmatpush1.msra.mxu0 0.0
    %698 = vmatprep.subr.mxu0 0.0
    %699 = vmatpush1.msra.mxu0 0.0
    %700 = vmatprep.subr.mxu0 0.0
    %701 = vmatpush1.msra.mxu0 0.0
    %702 = vmatprep.subr.mxu0 0.0
    %703 = vmatpush1.msra.mxu0 0.0
    %704 = vmatprep.mubr.f32.mxu0 0.0
    %705 = vmatmul.mubr.f32.gmra.mrb[0].mxu0 %v638
    %v706 = vpop.f32.mrb[0].mxu0
    %v707 = vadd.f32 0.0, %v706
    %v708 = vpop.f32.mrb[0].mxu0
    %709 = vdwg.mxu0
    %v710 = vadd.f32 %v637, %v707
    %v711 = vmul.f32 %v710, %v66
    %v712 = vtanh.pop %v711
    %v713 = vmul.f32 %v712, %v66
    %v714 = vadd.f32 %v713, %v67
    %v715 = vmul.f32 %v714, %v623
    %717 = vrot.lane.b32.xlu0 %v714, 64
    %v718 = vpop.permute.xlu0 %717
    %v720 = vmul.f32 %v714, %v718
    %722 = vrot.lane.b32.xlu0 %v720, 32
    %v723 = vpop.permute.xlu0 %722
    %v725 = vadd.f32 %v715, %v723
    %v726 = vtanh.pop %v725
    %728 = vrot.lane.b32.xlu0 %v726, 64
    %v729 = vpop.permute.xlu0 %728
    %v731 = vmul.f32 %v714, %v729
    %733 = vrot.lane.b32.xlu0 %v731, 32
    %v734 = vpop.permute.xlu0 %733
    %s736 = scalar_lea.vmem [#allocation3], 32
    %737 = vst.msk [vmem:[%s736] sm:$0xff] %vm91, %v734
    %s738 = scalar_lea.vmem [#allocation2], 40
    %v739 = vld [vmem:[%s738] sm:$0xff]
    %v740 = vsel %vm91, %v734, 0
    %742 = vmatprep.subr.mxu0 0.0
    %743 = vmatpush1.msra.mxu0 %v72
    %744 = vmatprep.subr.mxu0 0.0
    %745 = vmatpush1.msra.mxu0 %v73
    %746 = vmatprep.subr.mxu0 0.0
    %747 = vmatpush1.msra.mxu0 %v74
    %748 = vmatprep.subr.mxu0 0.0
    %749 = vmatpush1.msra.mxu0 %v75
    %750 = vmatprep.subr.mxu0 0.0
    %751 = vmatpush1.msra.mxu0 0.0
    %752 = vmatprep.subr.mxu0 0.0
    %753 = vmatpush1.msra.mxu0 0.0
    %754 = vmatprep.subr.mxu0 0.0
    %755 = vmatpush1.msra.mxu0 0.0
    %756 = vmatprep.subr.mxu0 0.0
    %757 = vmatpush1.msra.mxu0 0.0
    %758 = vmatprep.subr.mxu0 0.0
    %759 = vmatpush1.msra.mxu0 0.0
    %760 = vmatprep.subr.mxu0 0.0
    %761 = vmatpush1.msra.mxu0 0.0
    %762 = vmatprep.subr.mxu0 0.0
    %763 = vmatpush1.msra.mxu0 0.0
    %764 = vmatprep.subr.mxu0 0.0
    %765 = vmatpush1.msra.mxu0 0.0
    %766 = vmatprep.subr.mxu0 0.0
    %767 = vmatpush1.msra.mxu0 0.0
    %768 = vmatprep.subr.mxu0 0.0
    %769 = vmatpush1.msra.mxu0 0.0
    %770 = vmatprep.subr.mxu0 0.0
    %771 = vmatpush1.msra.mxu0 0.0
    %772 = vmatprep.subr.mxu0 0.0
    %773 = vmatpush1.msra.mxu0 0.0
    %774 = vmatprep.subr.mxu0 0.0
    %775 = vmatpush1.msra.mxu0 0.0
    %776 = vmatprep.subr.mxu0 0.0
    %777 = vmatpush1.msra.mxu0 0.0
    %778 = vmatprep.subr.mxu0 0.0
    %779 = vmatpush1.msra.mxu0 0.0
    %780 = vmatprep.subr.mxu0 0.0
    %781 = vmatpush1.msra.mxu0 0.0
    %782 = vmatprep.subr.mxu0 0.0
    %783 = vmatpush1.msra.mxu0 0.0
    %784 = vmatprep.subr.mxu0 0.0
    %785 = vmatpush1.msra.mxu0 0.0
    %786 = vmatprep.subr.mxu0 0.0
    %787 = vmatpush1.msra.mxu0 0.0
    %788 = vmatprep.subr.mxu0 0.0
    %789 = vmatpush1.msra.mxu0 0.0
    %790 = vmatprep.subr.mxu0 0.0
    %791 = vmatpush1.msra.mxu0 0.0
    %792 = vmatprep.subr.mxu0 0.0
    %793 = vmatpush1.msra.mxu0 0.0
    %794 = vmatprep.subr.mxu0 0.0
    %795 = vmatpush1.msra.mxu0 0.0
    %796 = vmatprep.subr.mxu0 0.0
    %797 = vmatpush1.msra.mxu0 0.0
    %798 = vmatprep.subr.mxu0 0.0
    %799 = vmatpush1.msra.mxu0 0.0
    %800 = vmatprep.subr.mxu0 0.0
    %801 = vmatpush1.msra.mxu0 0.0
    %802 = vmatprep.subr.mxu0 0.0
    %803 = vmatpush1.msra.mxu0 0.0
    %804 = vmatprep.subr.mxu0 0.0
    %805 = vmatpush1.msra.mxu0 0.0
    %806 = vmatprep.mubr.f32.mxu0 0.0
    %807 = vmatmul.mubr.f32.gmra.mrb[0].mxu0 %v740
    %v808 = vpop.f32.mrb[0].mxu0
    %v809 = vadd.f32 0.0, %v808
    %v810 = vpop.f32.mrb[0].mxu0
    %811 = vdwg.mxu0
    %v812 = vadd.f32 %v739, %v809
    %v813 = vmul.f32 %v812, %v66
    %v814 = vtanh.pop %v813
    %v815 = vmul.f32 %v814, %v66
    %v816 = vadd.f32 %v815, %v67
    %v817 = vmul.f32 %v816, %v725
    %819 = vrot.lane.b32.xlu0 %v816, 64
    %v820 = vpop.permute.xlu0 %819
    %v822 = vmul.f32 %v816, %v820
    %824 = vrot.lane.b32.xlu0 %v822, 32
    %v825 = vpop.permute.xlu0 %824
    %v827 = vadd.f32 %v817, %v825
    %v828 = vtanh.pop %v827
    %830 = vrot.lane.b32.xlu0 %v828, 64
    %v831 = vpop.permute.xlu0 %830
    %v833 = vmul.f32 %v816, %v831
    %835 = vrot.lane.b32.xlu0 %v833, 32
    %v836 = vpop.permute.xlu0 %835
    %s838 = scalar_lea.vmem [#allocation3], 40
    %839 = vst.msk [vmem:[%s838] sm:$0xff] %vm91, %v836
    %s840 = scalar_lea.vmem [#allocation2], 48
    %v841 = vld [vmem:[%s840] sm:$0xff]
    %v842 = vsel %vm91, %v836, 0
    %844 = vmatprep.subr.mxu0 0.0
    %845 = vmatpush1.msra.mxu0 %v72
    %846 = vmatprep.subr.mxu0 0.0
    %847 = vmatpush1.msra.mxu0 %v73
    %848 = vmatprep.subr.mxu0 0.0
    %849 = vmatpush1.msra.mxu0 %v74
    %850 = vmatprep.subr.mxu0 0.0
    %851 = vmatpush1.msra.mxu0 %v75
    %852 = vmatprep.subr.mxu0 0.0
    %853 = vmatpush1.msra.mxu0 0.0
    %854 = vmatprep.subr.mxu0 0.0
    %855 = vmatpush1.msra.mxu0 0.0
    %856 = vmatprep.subr.mxu0 0.0
    %857 = vmatpush1.msra.mxu0 0.0
    %858 = vmatprep.subr.mxu0 0.0
    %859 = vmatpush1.msra.mxu0 0.0
    %860 = vmatprep.subr.mxu0 0.0
    %861 = vmatpush1.msra.mxu0 0.0
    %862 = vmatprep.subr.mxu0 0.0
    %863 = vmatpush1.msra.mxu0 0.0
    %864 = vmatprep.subr.mxu0 0.0
    %865 = vmatpush1.msra.mxu0 0.0
    %866 = vmatprep.subr.mxu0 0.0
    %867 = vmatpush1.msra.mxu0 0.0
    %868 = vmatprep.subr.mxu0 0.0
    %869 = vmatpush1.msra.mxu0 0.0
    %870 = vmatprep.subr.mxu0 0.0
    %871 = vmatpush1.msra.mxu0 0.0
    %872 = vmatprep.subr.mxu0 0.0
    %873 = vmatpush1.msra.mxu0 0.0
    %874 = vmatprep.subr.mxu0 0.0
    %875 = vmatpush1.msra.mxu0 0.0
    %876 = vmatprep.subr.mxu0 0.0
    %877 = vmatpush1.msra.mxu0 0.0
    %878 = vmatprep.subr.mxu0 0.0
    %879 = vmatpush1.msra.mxu0 0.0
    %880 = vmatprep.subr.mxu0 0.0
    %881 = vmatpush1.msra.mxu0 0.0
    %882 = vmatprep.subr.mxu0 0.0
    %883 = vmatpush1.msra.mxu0 0.0
    %884 = vmatprep.subr.mxu0 0.0
    %885 = vmatpush1.msra.mxu0 0.0
    %886 = vmatprep.subr.mxu0 0.0
    %887 = vmatpush1.msra.mxu0 0.0
    %888 = vmatprep.subr.mxu0 0.0
    %889 = vmatpush1.msra.mxu0 0.0
    %890 = vmatprep.subr.mxu0 0.0
    %891 = vmatpush1.msra.mxu0 0.0
    %892 = vmatprep.subr.mxu0 0.0
    %893 = vmatpush1.msra.mxu0 0.0
    %894 = vmatprep.subr.mxu0 0.0
    %895 = vmatpush1.msra.mxu0 0.0
    %896 = vmatprep.subr.mxu0 0.0
    %897 = vmatpush1.msra.mxu0 0.0
    %898 = vmatprep.subr.mxu0 0.0
    %899 = vmatpush1.msra.mxu0 0.0
    %900 = vmatprep.subr.mxu0 0.0
    %901 = vmatpush1.msra.mxu0 0.0
    %902 = vmatprep.subr.mxu0 0.0
    %903 = vmatpush1.msra.mxu0 0.0
    %904 = vmatprep.subr.mxu0 0.0
    %905 = vmatpush1.msra.mxu0 0.0
    %906 = vmatprep.subr.mxu0 0.0
    %907 = vmatpush1.msra.mxu0 0.0
    %908 = vmatprep.mubr.f32.mxu0 0.0
    %909 = vmatmul.mubr.f32.gmra.mrb[0].mxu0 %v842
    %v910 = vpop.f32.mrb[0].mxu0
    %v911 = vadd.f32 0.0, %v910
    %v912 = vpop.f32.mrb[0].mxu0
    %913 = vdwg.mxu0
    %v914 = vadd.f32 %v841, %v911
    %v915 = vmul.f32 %v914, %v66
    %v916 = vtanh.pop %v915
    %v917 = vmul.f32 %v916, %v66
    %v918 = vadd.f32 %v917, %v67
    %v919 = vmul.f32 %v918, %v827
    %921 = vrot.lane.b32.xlu0 %v918, 64
    %v922 = vpop.permute.xlu0 %921
    %v924 = vmul.f32 %v918, %v922
    %926 = vrot.lane.b32.xlu0 %v924, 32
    %v927 = vpop.permute.xlu0 %926
    %v929 = vadd.f32 %v919, %v927
    %v930 = vtanh.pop %v929
    %932 = vrot.lane.b32.xlu0 %v930, 64
    %v933 = vpop.permute.xlu0 %932
    %v935 = vmul.f32 %v918, %v933
    %937 = vrot.lane.b32.xlu0 %v935, 32
    %v938 = vpop.permute.xlu0 %937
    %s940 = scalar_lea.vmem [#allocation3], 48
    %941 = vst.msk [vmem:[%s940] sm:$0xff] %vm91, %v938
    %s942 = scalar_lea.vmem [#allocation2], 56
    %v943 = vld [vmem:[%s942] sm:$0xff]
    %v944 = vsel %vm91, %v938, 0
    %946 = vmatprep.subr.mxu0 0.0
    %947 = vmatpush1.msra.mxu0 %v72
    %948 = vmatprep.subr.mxu0 0.0
    %949 = vmatpush1.msra.mxu0 %v73
    %950 = vmatprep.subr.mxu0 0.0
    %951 = vmatpush1.msra.mxu0 %v74
    %952 = vmatprep.subr.mxu0 0.0
    %953 = vmatpush1.msra.mxu0 %v75
    %954 = vmatprep.subr.mxu0 0.0
    %955 = vmatpush1.msra.mxu0 0.0
    %956 = vmatprep.subr.mxu0 0.0
    %957 = vmatpush1.msra.mxu0 0.0
    %958 = vmatprep.subr.mxu0 0.0
    %959 = vmatpush1.msra.mxu0 0.0
    %960 = vmatprep.subr.mxu0 0.0
    %961 = vmatpush1.msra.mxu0 0.0
    %962 = vmatprep.subr.mxu0 0.0
    %963 = vmatpush1.msra.mxu0 0.0
    %964 = vmatprep.subr.mxu0 0.0
    %965 = vmatpush1.msra.mxu0 0.0
    %966 = vmatprep.subr.mxu0 0.0
    %967 = vmatpush1.msra.mxu0 0.0
    %968 = vmatprep.subr.mxu0 0.0
    %969 = vmatpush1.msra.mxu0 0.0
    %970 = vmatprep.subr.mxu0 0.0
    %971 = vmatpush1.msra.mxu0 0.0
    %972 = vmatprep.subr.mxu0 0.0
    %973 = vmatpush1.msra.mxu0 0.0
    %974 = vmatprep.subr.mxu0 0.0
    %975 = vmatpush1.msra.mxu0 0.0
    %976 = vmatprep.subr.mxu0 0.0
    %977 = vmatpush1.msra.mxu0 0.0
    %978 = vmatprep.subr.mxu0 0.0
    %979 = vmatpush1.msra.mxu0 0.0
    %980 = vmatprep.subr.mxu0 0.0
    %981 = vmatpush1.msra.mxu0 0.0
    %982 = vmatprep.subr.mxu0 0.0
    %983 = vmatpush1.msra.mxu0 0.0
    %984 = vmatprep.subr.mxu0 0.0
    %985 = vmatpush1.msra.mxu0 0.0
    %986 = vmatprep.subr.mxu0 0.0
    %987 = vmatpush1.msra.mxu0 0.0
    %988 = vmatprep.subr.mxu0 0.0
    %989 = vmatpush1.msra.mxu0 0.0
    %990 = vmatprep.subr.mxu0 0.0
    %991 = vmatpush1.msra.mxu0 0.0
    %992 = vmatprep.subr.mxu0 0.0
    %993 = vmatpush1.msra.mxu0 0.0
    %994 = vmatprep.subr.mxu0 0.0
    %995 = vmatpush1.msra.mxu0 0.0
    %996 = vmatprep.subr.mxu0 0.0
    %997 = vmatpush1.msra.mxu0 0.0
    %998 = vmatprep.subr.mxu0 0.0
    %999 = vmatpush1.msra.mxu0 0.0
    %1000 = vmatprep.subr.mxu0 0.0
    %1001 = vmatpush1.msra.mxu0 0.0
    %1002 = vmatprep.subr.mxu0 0.0
    %1003 = vmatpush1.msra.mxu0 0.0
    %1004 = vmatprep.subr.mxu0 0.0
    %1005 = vmatpush1.msra.mxu0 0.0
    %1006 = vmatprep.subr.mxu0 0.0
    %1007 = vmatpush1.msra.mxu0 0.0
    %1008 = vmatprep.subr.mxu0 0.0
    %1009 = vmatpush1.msra.mxu0 0.0
    %1010 = vmatprep.mubr.f32.mxu0 0.0
    %1011 = vmatmul.mubr.f32.gmra.mrb[0].mxu0 %v944
    %v1012 = vpop.f32.mrb[0].mxu0
    %v1013 = vadd.f32 0.0, %v1012
    %v1014 = vpop.f32.mrb[0].mxu0
    %1015 = vdwg.mxu0
    %v1016 = vadd.f32 %v943, %v1013
    %v1017 = vmul.f32 %v1016, %v66
    %v1018 = vtanh.pop %v1017
    %v1019 = vmul.f32 %v1018, %v66
    %v1020 = vadd.f32 %v1019, %v67
    %v1021 = vmul.f32 %v1020, %v929
    %1023 = vrot.lane.b32.xlu0 %v1020, 64
    %v1024 = vpop.permute.xlu0 %1023
    %v1026 = vmul.f32 %v1020, %v1024
    %1028 = vrot.lane.b32.xlu0 %v1026, 32
    %v1029 = vpop.permute.xlu0 %1028
    %v1031 = vadd.f32 %v1021, %v1029
    %v1032 = vtanh.pop %v1031
    %1034 = vrot.lane.b32.xlu0 %v1032, 64
    %v1035 = vpop.permute.xlu0 %1034
    %v1037 = vmul.f32 %v1020, %v1035
    %1039 = vrot.lane.b32.xlu0 %v1037, 32
    %v1040 = vpop.permute.xlu0 %1039
    %s1042 = scalar_lea.vmem [#allocation3], 56
    %1043 = vst.msk [vmem:[%s1042] sm:$0xff] %vm91, %v1040
    %v1044 = vld [vmem:[%s4] sm:$0xff]
    %v1045 = vld [vmem:[%s4 + $0x8] sm:$0xff]
    %v1046 = vld [vmem:[%s4 + $0x10] sm:$0xff]
    %v1047 = vld [vmem:[%s4 + $0x18] sm:$0xff]
    %v1048 = vld [vmem:[#allocation4] sm:$0xff]
    %v1049 = vld [vmem:[#allocation4 + $0x8] sm:$0xff]
    %v1050 = vld [vmem:[#allocation4 + $0x10] sm:$0xff]
    %v1051 = vld [vmem:[#allocation4 + $0x18] sm:$0xff]
    %v1052 = vld [vmem:[%s6] sm:$0x1]
    %v1053 = vld [vmem:[#allocation3] sm:$0xff]
    %v1054 = vld [vmem:[#allocation3 + $0x8] sm:$0xff]
    %v1055 = vld [vmem:[#allocation3 + $0x10] sm:$0xff]
    %v1056 = vld [vmem:[#allocation3 + $0x18] sm:$0xff]
    %v1057 = vld [vmem:[#allocation3 + $0x20] sm:$0xff]
    %v1058 = vld [vmem:[#allocation3 + $0x28] sm:$0xff]
    %v1059 = vld [vmem:[#allocation3 + $0x30] sm:$0xff]
    %v1060 = vld [vmem:[#allocation3 + $0x38] sm:$0xff]
    %v1062 = vlaneseq
    %v1063 = vshrl.u32 %v1062, 7
    %v1064 = vsub.s32 0, %v1063
    %v1065 = vrot.slane %v1052, %v1064
    %v1068 = vsel %vm91, %v1053, 0
    %v1071 = vsel %vm91, %v1054, 0
    %v1074 = vsel %vm91, %v1055, 0
    %v1077 = vsel %vm91, %v1056, 0
    %v1080 = vsel %vm91, %v1057, 0
    %v1083 = vsel %vm91, %v1058, 0
    %v1086 = vsel %vm91, %v1059, 0
    %v1089 = vsel %vm91, %v1060, 0
    %1091 = vmatprep.subr.mxu0 0.0
    %1092 = vmatpush1.msra.mxu0 %v1044
    %1093 = vmatprep.subr.mxu0 0.0
    %1094 = vmatpush1.msra.mxu0 %v1045
    %1095 = vmatprep.subr.mxu0 0.0
    %1096 = vmatpush1.msra.mxu0 %v1046
    %1097 = vmatprep.subr.mxu0 0.0
    %1098 = vmatpush1.msra.mxu0 %v1047
    %1099 = vmatprep.subr.mxu0 0.0
    %1100 = vmatpush1.msra.mxu0 0.0
    %1101 = vmatprep.subr.mxu0 0.0
    %1102 = vmatpush1.msra.mxu0 0.0
    %1103 = vmatprep.subr.mxu0 0.0
    %1104 = vmatpush1.msra.mxu0 0.0
    %1105 = vmatprep.subr.mxu0 0.0
    %1106 = vmatpush1.msra.mxu0 0.0
    %1107 = vmatprep.subr.mxu0 0.0
    %1108 = vmatpush1.msra.mxu0 0.0
    %1109 = vmatprep.subr.mxu0 0.0
    %1110 = vmatpush1.msra.mxu0 0.0
    %1111 = vmatprep.subr.mxu0 0.0
    %1112 = vmatpush1.msra.mxu0 0.0
    %1113 = vmatprep.subr.mxu0 0.0
    %1114 = vmatpush1.msra.mxu0 0.0
    %1115 = vmatprep.subr.mxu0 0.0
    %1116 = vmatpush1.msra.mxu0 0.0
    %1117 = vmatprep.subr.mxu0 0.0
    %1118 = vmatpush1.msra.mxu0 0.0
    %1119 = vmatprep.subr.mxu0 0.0
    %1120 = vmatpush1.msra.mxu0 0.0
    %1121 = vmatprep.subr.mxu0 0.0
    %1122 = vmatpush1.msra.mxu0 0.0
    %1123 = vmatprep.subr.mxu0 0.0
    %1124 = vmatpush1.msra.mxu0 0.0
    %1125 = vmatprep.subr.mxu0 0.0
    %1126 = vmatpush1.msra.mxu0 0.0
    %1127 = vmatprep.subr.mxu0 0.0
    %1128 = vmatpush1.msra.mxu0 0.0
    %1129 = vmatprep.subr.mxu0 0.0
    %1130 = vmatpush1.msra.mxu0 0.0
    %1131 = vmatprep.subr.mxu0 0.0
    %1132 = vmatpush1.msra.mxu0 0.0
    %1133 = vmatprep.subr.mxu0 0.0
    %1134 = vmatpush1.msra.mxu0 0.0
    %1135 = vmatprep.subr.mxu0 0.0
    %1136 = vmatpush1.msra.mxu0 0.0
    %1137 = vmatprep.subr.mxu0 0.0
    %1138 = vmatpush1.msra.mxu0 0.0
    %1139 = vmatprep.subr.mxu0 0.0
    %1140 = vmatpush1.msra.mxu0 0.0
    %1141 = vmatprep.subr.mxu0 0.0
    %1142 = vmatpush1.msra.mxu0 0.0
    %1143 = vmatprep.subr.mxu0 0.0
    %1144 = vmatpush1.msra.mxu0 0.0
    %1145 = vmatprep.subr.mxu0 0.0
    %1146 = vmatpush1.msra.mxu0 0.0
    %1147 = vmatprep.subr.mxu0 0.0
    %1148 = vmatpush1.msra.mxu0 0.0
    %1149 = vmatprep.subr.mxu0 0.0
    %1150 = vmatpush1.msra.mxu0 0.0
    %1151 = vmatprep.subr.mxu0 0.0
    %1152 = vmatpush1.msra.mxu0 0.0
    %1153 = vmatprep.subr.mxu0 0.0
    %1154 = vmatpush1.msra.mxu0 0.0
    %1155 = vmatprep.mubr.f32.mxu0 0.0
    %1156 = vmatmul.mubr.f32.gmra.mrb[0].mxu0 %v1068
    %v1157 = vpop.f32.mrb[0].mxu0
    %v1158 = vadd.f32 %v1065, %v1157
    %v1159 = vpop.f32.mrb[0].mxu0
    %1160 = vmatprep.mubr.f32.mxu0 0.0
    %1161 = vmatmul.mubr.f32.gmra.mrb[0].mxu0 %v1071
    %v1162 = vpop.f32.mrb[0].mxu0
    %v1163 = vadd.f32 %v1065, %v1162
    %v1164 = vpop.f32.mrb[0].mxu0
    %1165 = vmatprep.mubr.f32.mxu0 0.0
    %1166 = vmatmul.mubr.f32.gmra.mrb[0].mxu0 %v1074
    %v1167 = vpop.f32.mrb[0].mxu0
    %v1168 = vadd.f32 %v1065, %v1167
    %v1169 = vpop.f32.mrb[0].mxu0
    %1170 = vmatprep.mubr.f32.mxu0 0.0
    %1171 = vmatmul.mubr.f32.gmra.mrb[0].mxu0 %v1077
    %v1172 = vpop.f32.mrb[0].mxu0
    %v1173 = vadd.f32 %v1065, %v1172
    %v1174 = vpop.f32.mrb[0].mxu0
    %1175 = vmatprep.mubr.f32.mxu0 0.0
    %1176 = vmatmul.mubr.f32.gmra.mrb[0].mxu0 %v1080
    %v1177 = vpop.f32.mrb[0].mxu0
    %v1178 = vadd.f32 %v1065, %v1177
    %v1179 = vpop.f32.mrb[0].mxu0
    %1180 = vmatprep.mubr.f32.mxu0 0.0
    %1181 = vmatmul.mubr.f32.gmra.mrb[0].mxu0 %v1083
    %v1182 = vpop.f32.mrb[0].mxu0
    %v1183 = vadd.f32 %v1065, %v1182
    %v1184 = vpop.f32.mrb[0].mxu0
    %1185 = vmatprep.mubr.f32.mxu0 0.0
    %1186 = vmatmul.mubr.f32.gmra.mrb[0].mxu0 %v1086
    %v1187 = vpop.f32.mrb[0].mxu0
    %v1188 = vadd.f32 %v1065, %v1187
    %v1189 = vpop.f32.mrb[0].mxu0
    %1190 = vmatprep.mubr.f32.mxu0 0.0
    %1191 = vmatmul.mubr.f32.gmra.mrb[0].mxu0 %v1089
    %v1192 = vpop.f32.mrb[0].mxu0
    %v1193 = vadd.f32 %v1065, %v1192
    %v1194 = vpop.f32.mrb[0].mxu0
    %1195 = vdwg.mxu0
    %1196 = vst [vmem:[#allocation2] sm:$0xff] %v1158
    %1197 = vst [vmem:[#allocation2 + $0x8] sm:$0xff] %v1163
    %1198 = vst [vmem:[#allocation2 + $0x10] sm:$0xff] %v1168
    %1199 = vst [vmem:[#allocation2 + $0x18] sm:$0xff] %v1173
    %1200 = vst [vmem:[#allocation2 + $0x20] sm:$0xff] %v1178
    %1201 = vst [vmem:[#allocation2 + $0x28] sm:$0xff] %v1183
    %1202 = vst [vmem:[#allocation2 + $0x30] sm:$0xff] %v1188
    %1203 = vst [vmem:[#allocation2 + $0x38] sm:$0xff] %v1193
    %v1204 = vld [vmem:[#allocation2] sm:$0xff]
    %1205 = vmatprep.subr.mxu0 0.0
    %1206 = vmatpush1.msra.mxu0 %v1048
    %1207 = vmatprep.subr.mxu0 0.0
    %1208 = vmatpush1.msra.mxu0 %v1049
    %1209 = vmatprep.subr.mxu0 0.0
    %1210 = vmatpush1.msra.mxu0 %v1050
    %1211 = vmatprep.subr.mxu0 0.0
    %1212 = vmatpush1.msra.mxu0 %v1051
    %1213 = vmatprep.subr.mxu0 0.0
    %1214 = vmatpush1.msra.mxu0 0.0
    %1215 = vmatprep.subr.mxu0 0.0
    %1216 = vmatpush1.msra.mxu0 0.0
    %1217 = vmatprep.subr.mxu0 0.0
    %1218 = vmatpush1.msra.mxu0 0.0
    %1219 = vmatprep.subr.mxu0 0.0
    %1220 = vmatpush1.msra.mxu0 0.0
    %1221 = vmatprep.subr.mxu0 0.0
    %1222 = vmatpush1.msra.mxu0 0.0
    %1223 = vmatprep.subr.mxu0 0.0
    %1224 = vmatpush1.msra.mxu0 0.0
    %1225 = vmatprep.subr.mxu0 0.0
    %1226 = vmatpush1.msra.mxu0 0.0
    %1227 = vmatprep.subr.mxu0 0.0
    %1228 = vmatpush1.msra.mxu0 0.0
    %1229 = vmatprep.subr.mxu0 0.0
    %1230 = vmatpush1.msra.mxu0 0.0
    %1231 = vmatprep.subr.mxu0 0.0
    %1232 = vmatpush1.msra.mxu0 0.0
    %1233 = vmatprep.subr.mxu0 0.0
    %1234 = vmatpush1.msra.mxu0 0.0
    %1235 = vmatprep.subr.mxu0 0.0
    %1236 = vmatpush1.msra.mxu0 0.0
    %1237 = vmatprep.subr.mxu0 0.0
    %1238 = vmatpush1.msra.mxu0 0.0
    %1239 = vmatprep.subr.mxu0 0.0
    %1240 = vmatpush1.msra.mxu0 0.0
    %1241 = vmatprep.subr.mxu0 0.0
    %1242 = vmatpush1.msra.mxu0 0.0
    %1243 = vmatprep.subr.mxu0 0.0
    %1244 = vmatpush1.msra.mxu0 0.0
    %1245 = vmatprep.subr.mxu0 0.0
    %1246 = vmatpush1.msra.mxu0 0.0
    %1247 = vmatprep.subr.mxu0 0.0
    %1248 = vmatpush1.msra.mxu0 0.0
    %1249 = vmatprep.subr.mxu0 0.0
    %1250 = vmatpush1.msra.mxu0 0.0
    %1251 = vmatprep.subr.mxu0 0.0
    %1252 = vmatpush1.msra.mxu0 0.0
    %1253 = vmatprep.subr.mxu0 0.0
    %1254 = vmatpush1.msra.mxu0 0.0
    %1255 = vmatprep.subr.mxu0 0.0
    %1256 = vmatpush1.msra.mxu0 0.0
    %1257 = vmatprep.subr.mxu0 0.0
    %1258 = vmatpush1.msra.mxu0 0.0
    %1259 = vmatprep.subr.mxu0 0.0
    %1260 = vmatpush1.msra.mxu0 0.0
    %1261 = vmatprep.subr.mxu0 0.0
    %1262 = vmatpush1.msra.mxu0 0.0
    %1263 = vmatprep.subr.mxu0 0.0
    %1264 = vmatpush1.msra.mxu0 0.0
    %1265 = vmatprep.subr.mxu0 0.0
    %1266 = vmatpush1.msra.mxu0 0.0
    %1267 = vmatprep.subr.mxu0 0.0
    %1268 = vmatpush1.msra.mxu0 0.0
    %1269 = vmatprep.mubr.f32.mxu0 0.0
    %1270 = vmatmul.mubr.f32.gmra.mrb[0].mxu0 %v231
    %v1271 = vpop.f32.mrb[0].mxu0
    %v1272 = vadd.f32 0.0, %v1271
    %v1273 = vpop.f32.mrb[0].mxu0
    %1274 = vdwg.mxu0
    %v1275 = vadd.f32 %v1204, %v1272
    %v1276 = vmul.f32 %v1275, %v66
    %v1277 = vtanh.pop %v1276
    %v1278 = vmul.f32 %v1277, %v66
    %v1279 = vadd.f32 %v1278, %v67
    %v1280 = vmul.f32 %v1279, 0.0
    %1282 = vrot.lane.b32.xlu0 %v1279, 64
    %v1283 = vpop.permute.xlu0 %1282
    %v1285 = vmul.f32 %v1279, %v1283
    %1287 = vrot.lane.b32.xlu0 %v1285, 32
    %v1288 = vpop.permute.xlu0 %1287
    %v1290 = vadd.f32 %v1280, %v1288
    %v1291 = vtanh.pop %v1290
    %1293 = vrot.lane.b32.xlu0 %v1291, 64
    %v1294 = vpop.permute.xlu0 %1293
    %v1296 = vmul.f32 %v1279, %v1294
    %1298 = vrot.lane.b32.xlu0 %v1296, 32
    %v1299 = vpop.permute.xlu0 %1298
    %1301 = vst.msk [vmem:[#allocation3] sm:$0xff] %vm91, %v1299
    %v1302 = vld [vmem:[%s330] sm:$0xff]
    %v1303 = vsel %vm91, %v1299, 0
    %1305 = vmatprep.subr.mxu0 0.0
    %1306 = vmatpush1.msra.mxu0 %v1048
    %1307 = vmatprep.subr.mxu0 0.0
    %1308 = vmatpush1.msra.mxu0 %v1049
    %1309 = vmatprep.subr.mxu0 0.0
    %1310 = vmatpush1.msra.mxu0 %v1050
    %1311 = vmatprep.subr.mxu0 0.0
    %1312 = vmatpush1.msra.mxu0 %v1051
    %1313 = vmatprep.subr.mxu0 0.0
    %1314 = vmatpush1.msra.mxu0 0.0
    %1315 = vmatprep.subr.mxu0 0.0
    %1316 = vmatpush1.msra.mxu0 0.0
    %1317 = vmatprep.subr.mxu0 0.0
    %1318 = vmatpush1.msra.mxu0 0.0
    %1319 = vmatprep.subr.mxu0 0.0
    %1320 = vmatpush1.msra.mxu0 0.0
    %1321 = vmatprep.subr.mxu0 0.0
    %1322 = vmatpush1.msra.mxu0 0.0
    %1323 = vmatprep.subr.mxu0 0.0
    %1324 = vmatpush1.msra.mxu0 0.0
    %1325 = vmatprep.subr.mxu0 0.0
    %1326 = vmatpush1.msra.mxu0 0.0
    %1327 = vmatprep.subr.mxu0 0.0
    %1328 = vmatpush1.msra.mxu0 0.0
    %1329 = vmatprep.subr.mxu0 0.0
    %1330 = vmatpush1.msra.mxu0 0.0
    %1331 = vmatprep.subr.mxu0 0.0
    %1332 = vmatpush1.msra.mxu0 0.0
    %1333 = vmatprep.subr.mxu0 0.0
    %1334 = vmatpush1.msra.mxu0 0.0
    %1335 = vmatprep.subr.mxu0 0.0
    %1336 = vmatpush1.msra.mxu0 0.0
    %1337 = vmatprep.subr.mxu0 0.0
    %1338 = vmatpush1.msra.mxu0 0.0
    %1339 = vmatprep.subr.mxu0 0.0
    %1340 = vmatpush1.msra.mxu0 0.0
    %1341 = vmatprep.subr.mxu0 0.0
    %1342 = vmatpush1.msra.mxu0 0.0
    %1343 = vmatprep.subr.mxu0 0.0
    %1344 = vmatpush1.msra.mxu0 0.0
    %1345 = vmatprep.subr.mxu0 0.0
    %1346 = vmatpush1.msra.mxu0 0.0
    %1347 = vmatprep.subr.mxu0 0.0
    %1348 = vmatpush1.msra.mxu0 0.0
    %1349 = vmatprep.subr.mxu0 0.0
    %1350 = vmatpush1.msra.mxu0 0.0
    %1351 = vmatprep.subr.mxu0 0.0
    %1352 = vmatpush1.msra.mxu0 0.0
    %1353 = vmatprep.subr.mxu0 0.0
    %1354 = vmatpush1.msra.mxu0 0.0
    %1355 = vmatprep.subr.mxu0 0.0
    %1356 = vmatpush1.msra.mxu0 0.0
    %1357 = vmatprep.subr.mxu0 0.0
    %1358 = vmatpush1.msra.mxu0 0.0
    %1359 = vmatprep.subr.mxu0 0.0
    %1360 = vmatpush1.msra.mxu0 0.0
    %1361 = vmatprep.subr.mxu0 0.0
    %1362 = vmatpush1.msra.mxu0 0.0
    %1363 = vmatprep.subr.mxu0 0.0
    %1364 = vmatpush1.msra.mxu0 0.0
    %1365 = vmatprep.subr.mxu0 0.0
    %1366 = vmatpush1.msra.mxu0 0.0
    %1367 = vmatprep.subr.mxu0 0.0
    %1368 = vmatpush1.msra.mxu0 0.0
    %1369 = vmatprep.mubr.f32.mxu0 0.0
    %1370 = vmatmul.mubr.f32.gmra.mrb[0].mxu0 %v1303
    %v1371 = vpop.f32.mrb[0].mxu0
    %v1372 = vadd.f32 0.0, %v1371
    %v1373 = vpop.f32.mrb[0].mxu0
    %1374 = vdwg.mxu0
    %v1375 = vadd.f32 %v1302, %v1372
    %v1376 = vmul.f32 %v1375, %v66
    %v1377 = vtanh.pop %v1376
    %v1378 = vmul.f32 %v1377, %v66
    %v1379 = vadd.f32 %v1378, %v67
    %v1380 = vmul.f32 %v1379, %v1290
    %1382 = vrot.lane.b32.xlu0 %v1379, 64
    %v1383 = vpop.permute.xlu0 %1382
    %v1385 = vmul.f32 %v1379, %v1383
    %1387 = vrot.lane.b32.xlu0 %v1385, 32
    %v1388 = vpop.permute.xlu0 %1387
    %v1390 = vadd.f32 %v1380, %v1388
    %v1391 = vtanh.pop %v1390
    %1393 = vrot.lane.b32.xlu0 %v1391, 64
    %v1394 = vpop.permute.xlu0 %1393
    %v1396 = vmul.f32 %v1379, %v1394
    %1398 = vrot.lane.b32.xlu0 %v1396, 32
    %v1399 = vpop.permute.xlu0 %1398
    %1401 = vst.msk [vmem:[%s430] sm:$0xff] %vm91, %v1399
    %v1402 = vld [vmem:[%s432] sm:$0xff]
    %v1403 = vsel %vm91, %v1399, 0
    %1405 = vmatprep.subr.mxu0 0.0
    %1406 = vmatpush1.msra.mxu0 %v1048
    %1407 = vmatprep.subr.mxu0 0.0
    %1408 = vmatpush1.msra.mxu0 %v1049
    %1409 = vmatprep.subr.mxu0 0.0
    %1410 = vmatpush1.msra.mxu0 %v1050
    %1411 = vmatprep.subr.mxu0 0.0
    %1412 = vmatpush1.msra.mxu0 %v1051
    %1413 = vmatprep.subr.mxu0 0.0
    %1414 = vmatpush1.msra.mxu0 0.0
    %1415 = vmatprep.subr.mxu0 0.0
    %1416 = vmatpush1.msra.mxu0 0.0
    %1417 = vmatprep.subr.mxu0 0.0
    %1418 = vmatpush1.msra.mxu0 0.0
    %1419 = vmatprep.subr.mxu0 0.0
    %1420 = vmatpush1.msra.mxu0 0.0
    %1421 = vmatprep.subr.mxu0 0.0
    %1422 = vmatpush1.msra.mxu0 0.0
    %1423 = vmatprep.subr.mxu0 0.0
    %1424 = vmatpush1.msra.mxu0 0.0
    %1425 = vmatprep.subr.mxu0 0.0
    %1426 = vmatpush1.msra.mxu0 0.0
    %1427 = vmatprep.subr.mxu0 0.0
    %1428 = vmatpush1.msra.mxu0 0.0
    %1429 = vmatprep.subr.mxu0 0.0
    %1430 = vmatpush1.msra.mxu0 0.0
    %1431 = vmatprep.subr.mxu0 0.0
    %1432 = vmatpush1.msra.mxu0 0.0
    %1433 = vmatprep.subr.mxu0 0.0
    %1434 = vmatpush1.msra.mxu0 0.0
    %1435 = vmatprep.subr.mxu0 0.0
    %1436 = vmatpush1.msra.mxu0 0.0
    %1437 = vmatprep.subr.mxu0 0.0
    %1438 = vmatpush1.msra.mxu0 0.0
    %1439 = vmatprep.subr.mxu0 0.0
    %1440 = vmatpush1.msra.mxu0 0.0
    %1441 = vmatprep.subr.mxu0 0.0
    %1442 = vmatpush1.msra.mxu0 0.0
    %1443 = vmatprep.subr.mxu0 0.0
    %1444 = vmatpush1.msra.mxu0 0.0
    %1445 = vmatprep.subr.mxu0 0.0
    %1446 = vmatpush1.msra.mxu0 0.0
    %1447 = vmatprep.subr.mxu0 0.0
    %1448 = vmatpush1.msra.mxu0 0.0
    %1449 = vmatprep.subr.mxu0 0.0
    %1450 = vmatpush1.msra.mxu0 0.0
    %1451 = vmatprep.subr.mxu0 0.0
    %1452 = vmatpush1.msra.mxu0 0.0
    %1453 = vmatprep.subr.mxu0 0.0
    %1454 = vmatpush1.msra.mxu0 0.0
    %1455 = vmatprep.subr.mxu0 0.0
    %1456 = vmatpush1.msra.mxu0 0.0
    %1457 = vmatprep.subr.mxu0 0.0
    %1458 = vmatpush1.msra.mxu0 0.0
    %1459 = vmatprep.subr.mxu0 0.0
    %1460 = vmatpush1.msra.mxu0 0.0
    %1461 = vmatprep.subr.mxu0 0.0
    %1462 = vmatpush1.msra.mxu0 0.0
    %1463 = vmatprep.subr.mxu0 0.0
    %1464 = vmatpush1.msra.mxu0 0.0
    %1465 = vmatprep.subr.mxu0 0.0
    %1466 = vmatpush1.msra.mxu0 0.0
    %1467 = vmatprep.subr.mxu0 0.0
    %1468 = vmatpush1.msra.mxu0 0.0
    %1469 = vmatprep.mubr.f32.mxu0 0.0
    %1470 = vmatmul.mubr.f32.gmra.mrb[0].mxu0 %v1403
    %v1471 = vpop.f32.mrb[0].mxu0
    %v1472 = vadd.f32 0.0, %v1471
    %v1473 = vpop.f32.mrb[0].mxu0
    %1474 = vdwg.mxu0
    %v1475 = vadd.f32 %v1402, %v1472
    %v1476 = vmul.f32 %v1475, %v66
    %v1477 = vtanh.pop %v1476
    %v1478 = vmul.f32 %v1477, %v66
    %v1479 = vadd.f32 %v1478, %v67
    %v1480 = vmul.f32 %v1479, %v1390
    %1482 = vrot.lane.b32.xlu0 %v1479, 64
    %v1483 = vpop.permute.xlu0 %1482
    %v1485 = vmul.f32 %v1479, %v1483
    %1487 = vrot.lane.b32.xlu0 %v1485, 32
    %v1488 = vpop.permute.xlu0 %1487
    %v1490 = vadd.f32 %v1480, %v1488
    %v1491 = vtanh.pop %v1490
    %1493 = vrot.lane.b32.xlu0 %v1491, 64
    %v1494 = vpop.permute.xlu0 %1493
    %v1496 = vmul.f32 %v1479, %v1494
    %1498 = vrot.lane.b32.xlu0 %v1496, 32
    %v1499 = vpop.permute.xlu0 %1498
    %1501 = vst.msk [vmem:[%s532] sm:$0xff] %vm91, %v1499
    %v1502 = vld [vmem:[%s534] sm:$0xff]
    %v1503 = vsel %vm91, %v1499, 0
    %1505 = vmatprep.subr.mxu0 0.0
    %1506 = vmatpush1.msra.mxu0 %v1048
    %1507 = vmatprep.subr.mxu0 0.0
    %1508 = vmatpush1.msra.mxu0 %v1049
    %1509 = vmatprep.subr.mxu0 0.0
    %1510 = vmatpush1.msra.mxu0 %v1050
    %1511 = vmatprep.subr.mxu0 0.0
    %1512 = vmatpush1.msra.mxu0 %v1051
    %1513 = vmatprep.subr.mxu0 0.0
    %1514 = vmatpush1.msra.mxu0 0.0
    %1515 = vmatprep.subr.mxu0 0.0
    %1516 = vmatpush1.msra.mxu0 0.0
    %1517 = vmatprep.subr.mxu0 0.0
    %1518 = vmatpush1.msra.mxu0 0.0
    %1519 = vmatprep.subr.mxu0 0.0
    %1520 = vmatpush1.msra.mxu0 0.0
    %1521 = vmatprep.subr.mxu0 0.0
    %1522 = vmatpush1.msra.mxu0 0.0
    %1523 = vmatprep.subr.mxu0 0.0
    %1524 = vmatpush1.msra.mxu0 0.0
    %1525 = vmatprep.subr.mxu0 0.0
    %1526 = vmatpush1.msra.mxu0 0.0
    %1527 = vmatprep.subr.mxu0 0.0
    %1528 = vmatpush1.msra.mxu0 0.0
    %1529 = vmatprep.subr.mxu0 0.0
    %1530 = vmatpush1.msra.mxu0 0.0
    %1531 = vmatprep.subr.mxu0 0.0
    %1532 = vmatpush1.msra.mxu0 0.0
    %1533 = vmatprep.subr.mxu0 0.0
    %1534 = vmatpush1.msra.mxu0 0.0
    %1535 = vmatprep.subr.mxu0 0.0
    %1536 = vmatpush1.msra.mxu0 0.0
    %1537 = vmatprep.subr.mxu0 0.0
    %1538 = vmatpush1.msra.mxu0 0.0
    %1539 = vmatprep.subr.mxu0 0.0
    %1540 = vmatpush1.msra.mxu0 0.0
    %1541 = vmatprep.subr.mxu0 0.0
    %1542 = vmatpush1.msra.mxu0 0.0
    %1543 = vmatprep.subr.mxu0 0.0
    %1544 = vmatpush1.msra.mxu0 0.0
    %1545 = vmatprep.subr.mxu0 0.0
    %1546 = vmatpush1.msra.mxu0 0.0
    %1547 = vmatprep.subr.mxu0 0.0
    %1548 = vmatpush1.msra.mxu0 0.0
    %1549 = vmatprep.subr.mxu0 0.0
    %1550 = vmatpush1.msra.mxu0 0.0
    %1551 = vmatprep.subr.mxu0 0.0
    %1552 = vmatpush1.msra.mxu0 0.0
    %1553 = vmatprep.subr.mxu0 0.0
    %1554 = vmatpush1.msra.mxu0 0.0
    %1555 = vmatprep.subr.mxu0 0.0
    %1556 = vmatpush1.msra.mxu0 0.0
    %1557 = vmatprep.subr.mxu0 0.0
    %1558 = vmatpush1.msra.mxu0 0.0
    %1559 = vmatprep.subr.mxu0 0.0
    %1560 = vmatpush1.msra.mxu0 0.0
    %1561 = vmatprep.subr.mxu0 0.0
    %1562 = vmatpush1.msra.mxu0 0.0
    %1563 = vmatprep.subr.mxu0 0.0
    %1564 = vmatpush1.msra.mxu0 0.0
    %1565 = vmatprep.subr.mxu0 0.0
    %1566 = vmatpush1.msra.mxu0 0.0
    %1567 = vmatprep.subr.mxu0 0.0
    %1568 = vmatpush1.msra.mxu0 0.0
    %1569 = vmatprep.mubr.f32.mxu0 0.0
    %1570 = vmatmul.mubr.f32.gmra.mrb[0].mxu0 %v1503
    %v1571 = vpop.f32.mrb[0].mxu0
    %v1572 = vadd.f32 0.0, %v1571
    %v1573 = vpop.f32.mrb[0].mxu0
    %1574 = vdwg.mxu0
    %v1575 = vadd.f32 %v1502, %v1572
    %v1576 = vmul.f32 %v1575, %v66
    %v1577 = vtanh.pop %v1576
    %v1578 = vmul.f32 %v1577, %v66
    %v1579 = vadd.f32 %v1578, %v67
    %v1580 = vmul.f32 %v1579, %v1490
    %1582 = vrot.lane.b32.xlu0 %v1579, 64
    %v1583 = vpop.permute.xlu0 %1582
    %v1585 = vmul.f32 %v1579, %v1583
    %1587 = vrot.lane.b32.xlu0 %v1585, 32
    %v1588 = vpop.permute.xlu0 %1587
    %v1590 = vadd.f32 %v1580, %v1588
    %v1591 = vtanh.pop %v1590
    %1593 = vrot.lane.b32.xlu0 %v1591, 64
    %v1594 = vpop.permute.xlu0 %1593
    %v1596 = vmul.f32 %v1579, %v1594
    %1598 = vrot.lane.b32.xlu0 %v1596, 32
    %v1599 = vpop.permute.xlu0 %1598
    %1601 = vst.msk [vmem:[%s634] sm:$0xff] %vm91, %v1599
    %v1602 = vld [vmem:[%s636] sm:$0xff]
    %v1603 = vsel %vm91, %v1599, 0
    %1605 = vmatprep.subr.mxu0 0.0
    %1606 = vmatpush1.msra.mxu0 %v1048
    %1607 = vmatprep.subr.mxu0 0.0
    %1608 = vmatpush1.msra.mxu0 %v1049
    %1609 = vmatprep.subr.mxu0 0.0
    %1610 = vmatpush1.msra.mxu0 %v1050
    %1611 = vmatprep.subr.mxu0 0.0
    %1612 = vmatpush1.msra.mxu0 %v1051
    %1613 = vmatprep.subr.mxu0 0.0
    %1614 = vmatpush1.msra.mxu0 0.0
    %1615 = vmatprep.subr.mxu0 0.0
    %1616 = vmatpush1.msra.mxu0 0.0
    %1617 = vmatprep.subr.mxu0 0.0
    %1618 = vmatpush1.msra.mxu0 0.0
    %1619 = vmatprep.subr.mxu0 0.0
    %1620 = vmatpush1.msra.mxu0 0.0
    %1621 = vmatprep.subr.mxu0 0.0
    %1622 = vmatpush1.msra.mxu0 0.0
    %1623 = vmatprep.subr.mxu0 0.0
    %1624 = vmatpush1.msra.mxu0 0.0
    %1625 = vmatprep.subr.mxu0 0.0
    %1626 = vmatpush1.msra.mxu0 0.0
    %1627 = vmatprep.subr.mxu0 0.0
    %1628 = vmatpush1.msra.mxu0 0.0
    %1629 = vmatprep.subr.mxu0 0.0
    %1630 = vmatpush1.msra.mxu0 0.0
    %1631 = vmatprep.subr.mxu0 0.0
    %1632 = vmatpush1.msra.mxu0 0.0
    %1633 = vmatprep.subr.mxu0 0.0
    %1634 = vmatpush1.msra.mxu0 0.0
    %1635 = vmatprep.subr.mxu0 0.0
    %1636 = vmatpush1.msra.mxu0 0.0
    %1637 = vmatprep.subr.mxu0 0.0
    %1638 = vmatpush1.msra.mxu0 0.0
    %1639 = vmatprep.subr.mxu0 0.0
    %1640 = vmatpush1.msra.mxu0 0.0
    %1641 = vmatprep.subr.mxu0 0.0
    %1642 = vmatpush1.msra.mxu0 0.0
    %1643 = vmatprep.subr.mxu0 0.0
    %1644 = vmatpush1.msra.mxu0 0.0
    %1645 = vmatprep.subr.mxu0 0.0
    %1646 = vmatpush1.msra.mxu0 0.0
    %1647 = vmatprep.subr.mxu0 0.0
    %1648 = vmatpush1.msra.mxu0 0.0
    %1649 = vmatprep.subr.mxu0 0.0
    %1650 = vmatpush1.msra.mxu0 0.0
    %1651 = vmatprep.subr.mxu0 0.0
    %1652 = vmatpush1.msra.mxu0 0.0
    %1653 = vmatprep.subr.mxu0 0.0
    %1654 = vmatpush1.msra.mxu0 0.0
    %1655 = vmatprep.subr.mxu0 0.0
    %1656 = vmatpush1.msra.mxu0 0.0
    %1657 = vmatprep.subr.mxu0 0.0
    %1658 = vmatpush1.msra.mxu0 0.0
    %1659 = vmatprep.subr.mxu0 0.0
    %1660 = vmatpush1.msra.mxu0 0.0
    %1661 = vmatprep.subr.mxu0 0.0
    %1662 = vmatpush1.msra.mxu0 0.0
    %1663 = vmatprep.subr.mxu0 0.0
    %1664 = vmatpush1.msra.mxu0 0.0
    %1665 = vmatprep.subr.mxu0 0.0
    %1666 = vmatpush1.msra.mxu0 0.0
    %1667 = vmatprep.subr.mxu0 0.0
    %1668 = vmatpush1.msra.mxu0 0.0
    %1669 = vmatprep.mubr.f32.mxu0 0.0
    %1670 = vmatmul.mubr.f32.gmra.mrb[0].mxu0 %v1603
    %v1671 = vpop.f32.mrb[0].mxu0
    %v1672 = vadd.f32 0.0, %v1671
    %v1673 = vpop.f32.mrb[0].mxu0
    %1674 = vdwg.mxu0
    %v1675 = vadd.f32 %v1602, %v1672
    %v1676 = vmul.f32 %v1675, %v66
    %v1677 = vtanh.pop %v1676
    %v1678 = vmul.f32 %v1677, %v66
    %v1679 = vadd.f32 %v1678, %v67
    %v1680 = vmul.f32 %v1679, %v1590
    %1682 = vrot.lane.b32.xlu0 %v1679, 64
    %v1683 = vpop.permute.xlu0 %1682
    %v1685 = vmul.f32 %v1679, %v1683
    %1687 = vrot.lane.b32.xlu0 %v1685, 32
    %v1688 = vpop.permute.xlu0 %1687
    %v1690 = vadd.f32 %v1680, %v1688
    %v1691 = vtanh.pop %v1690
    %1693 = vrot.lane.b32.xlu0 %v1691, 64
    %v1694 = vpop.permute.xlu0 %1693
    %v1696 = vmul.f32 %v1679, %v1694
    %1698 = vrot.lane.b32.xlu0 %v1696, 32
    %v1699 = vpop.permute.xlu0 %1698
    %1701 = vst.msk [vmem:[%s736] sm:$0xff] %vm91, %v1699
    %v1702 = vld [vmem:[%s738] sm:$0xff]
    %v1703 = vsel %vm91, %v1699, 0
    %1705 = vmatprep.subr.mxu0 0.0
    %1706 = vmatpush1.msra.mxu0 %v1048
    %1707 = vmatprep.subr.mxu0 0.0
    %1708 = vmatpush1.msra.mxu0 %v1049
    %1709 = vmatprep.subr.mxu0 0.0
    %1710 = vmatpush1.msra.mxu0 %v1050
    %1711 = vmatprep.subr.mxu0 0.0
    %1712 = vmatpush1.msra.mxu0 %v1051
    %1713 = vmatprep.subr.mxu0 0.0
    %1714 = vmatpush1.msra.mxu0 0.0
    %1715 = vmatprep.subr.mxu0 0.0
    %1716 = vmatpush1.msra.mxu0 0.0
    %1717 = vmatprep.subr.mxu0 0.0
    %1718 = vmatpush1.msra.mxu0 0.0
    %1719 = vmatprep.subr.mxu0 0.0
    %1720 = vmatpush1.msra.mxu0 0.0
    %1721 = vmatprep.subr.mxu0 0.0
    %1722 = vmatpush1.msra.mxu0 0.0
    %1723 = vmatprep.subr.mxu0 0.0
    %1724 = vmatpush1.msra.mxu0 0.0
    %1725 = vmatprep.subr.mxu0 0.0
    %1726 = vmatpush1.msra.mxu0 0.0
    %1727 = vmatprep.subr.mxu0 0.0
    %1728 = vmatpush1.msra.mxu0 0.0
    %1729 = vmatprep.subr.mxu0 0.0
    %1730 = vmatpush1.msra.mxu0 0.0
    %1731 = vmatprep.subr.mxu0 0.0
    %1732 = vmatpush1.msra.mxu0 0.0
    %1733 = vmatprep.subr.mxu0 0.0
    %1734 = vmatpush1.msra.mxu0 0.0
    %1735 = vmatprep.subr.mxu0 0.0
    %1736 = vmatpush1.msra.mxu0 0.0
    %1737 = vmatprep.subr.mxu0 0.0
    %1738 = vmatpush1.msra.mxu0 0.0
    %1739 = vmatprep.subr.mxu0 0.0
    %1740 = vmatpush1.msra.mxu0 0.0
    %1741 = vmatprep.subr.mxu0 0.0
    %1742 = vmatpush1.msra.mxu0 0.0
    %1743 = vmatprep.subr.mxu0 0.0
    %1744 = vmatpush1.msra.mxu0 0.0
    %1745 = vmatprep.subr.mxu0 0.0
    %1746 = vmatpush1.msra.mxu0 0.0
    %1747 = vmatprep.subr.mxu0 0.0
    %1748 = vmatpush1.msra.mxu0 0.0
    %1749 = vmatprep.subr.mxu0 0.0
    %1750 = vmatpush1.msra.mxu0 0.0
    %1751 = vmatprep.subr.mxu0 0.0
    %1752 = vmatpush1.msra.mxu0 0.0
    %1753 = vmatprep.subr.mxu0 0.0
    %1754 = vmatpush1.msra.mxu0 0.0
    %1755 = vmatprep.subr.mxu0 0.0
    %1756 = vmatpush1.msra.mxu0 0.0
    %1757 = vmatprep.subr.mxu0 0.0
    %1758 = vmatpush1.msra.mxu0 0.0
    %1759 = vmatprep.subr.mxu0 0.0
    %1760 = vmatpush1.msra.mxu0 0.0
    %1761 = vmatprep.subr.mxu0 0.0
    %1762 = vmatpush1.msra.mxu0 0.0
    %1763 = vmatprep.subr.mxu0 0.0
    %1764 = vmatpush1.msra.mxu0 0.0
    %1765 = vmatprep.subr.mxu0 0.0
    %1766 = vmatpush1.msra.mxu0 0.0
    %1767 = vmatprep.subr.mxu0 0.0
    %1768 = vmatpush1.msra.mxu0 0.0
    %1769 = vmatprep.mubr.f32.mxu0 0.0
    %1770 = vmatmul.mubr.f32.gmra.mrb[0].mxu0 %v1703
    %v1771 = vpop.f32.mrb[0].mxu0
    %v1772 = vadd.f32 0.0, %v1771
    %v1773 = vpop.f32.mrb[0].mxu0
    %1774 = vdwg.mxu0
    %v1775 = vadd.f32 %v1702, %v1772
    %v1776 = vmul.f32 %v1775, %v66
    %v1777 = vtanh.pop %v1776
    %v1778 = vmul.f32 %v1777, %v66
    %v1779 = vadd.f32 %v1778, %v67
    %v1780 = vmul.f32 %v1779, %v1690
    %1782 = vrot.lane.b32.xlu0 %v1779, 64
    %v1783 = vpop.permute.xlu0 %1782
    %v1785 = vmul.f32 %v1779, %v1783
    %1787 = vrot.lane.b32.xlu0 %v1785, 32
    %v1788 = vpop.permute.xlu0 %1787
    %v1790 = vadd.f32 %v1780, %v1788
    %v1791 = vtanh.pop %v1790
    %1793 = vrot.lane.b32.xlu0 %v1791, 64
    %v1794 = vpop.permute.xlu0 %1793
    %v1796 = vmul.f32 %v1779, %v1794
    %1798 = vrot.lane.b32.xlu0 %v1796, 32
    %v1799 = vpop.permute.xlu0 %1798
    %1801 = vst.msk [vmem:[%s838] sm:$0xff] %vm91, %v1799
    %v1802 = vld [vmem:[%s840] sm:$0xff]
    %v1803 = vsel %vm91, %v1799, 0
    %1805 = vmatprep.subr.mxu0 0.0
    %1806 = vmatpush1.msra.mxu0 %v1048
    %1807 = vmatprep.subr.mxu0 0.0
    %1808 = vmatpush1.msra.mxu0 %v1049
    %1809 = vmatprep.subr.mxu0 0.0
    %1810 = vmatpush1.msra.mxu0 %v1050
    %1811 = vmatprep.subr.mxu0 0.0
    %1812 = vmatpush1.msra.mxu0 %v1051
    %1813 = vmatprep.subr.mxu0 0.0
    %1814 = vmatpush1.msra.mxu0 0.0
    %1815 = vmatprep.subr.mxu0 0.0
    %1816 = vmatpush1.msra.mxu0 0.0
    %1817 = vmatprep.subr.mxu0 0.0
    %1818 = vmatpush1.msra.mxu0 0.0
    %1819 = vmatprep.subr.mxu0 0.0
    %1820 = vmatpush1.msra.mxu0 0.0
    %1821 = vmatprep.subr.mxu0 0.0
    %1822 = vmatpush1.msra.mxu0 0.0
    %1823 = vmatprep.subr.mxu0 0.0
    %1824 = vmatpush1.msra.mxu0 0.0
    %1825 = vmatprep.subr.mxu0 0.0
    %1826 = vmatpush1.msra.mxu0 0.0
    %1827 = vmatprep.subr.mxu0 0.0
    %1828 = vmatpush1.msra.mxu0 0.0
    %1829 = vmatprep.subr.mxu0 0.0
    %1830 = vmatpush1.msra.mxu0 0.0
    %1831 = vmatprep.subr.mxu0 0.0
    %1832 = vmatpush1.msra.mxu0 0.0
    %1833 = vmatprep.subr.mxu0 0.0
    %1834 = vmatpush1.msra.mxu0 0.0
    %1835 = vmatprep.subr.mxu0 0.0
    %1836 = vmatpush1.msra.mxu0 0.0
    %1837 = vmatprep.subr.mxu0 0.0
    %1838 = vmatpush1.msra.mxu0 0.0
    %1839 = vmatprep.subr.mxu0 0.0
    %1840 = vmatpush1.msra.mxu0 0.0
    %1841 = vmatprep.subr.mxu0 0.0
    %1842 = vmatpush1.msra.mxu0 0.0
    %1843 = vmatprep.subr.mxu0 0.0
    %1844 = vmatpush1.msra.mxu0 0.0
    %1845 = vmatprep.subr.mxu0 0.0
    %1846 = vmatpush1.msra.mxu0 0.0
    %1847 = vmatprep.subr.mxu0 0.0
    %1848 = vmatpush1.msra.mxu0 0.0
    %1849 = vmatprep.subr.mxu0 0.0
    %1850 = vmatpush1.msra.mxu0 0.0
    %1851 = vmatprep.subr.mxu0 0.0
    %1852 = vmatpush1.msra.mxu0 0.0
    %1853 = vmatprep.subr.mxu0 0.0
    %1854 = vmatpush1.msra.mxu0 0.0
    %1855 = vmatprep.subr.mxu0 0.0
    %1856 = vmatpush1.msra.mxu0 0.0
    %1857 = vmatprep.subr.mxu0 0.0
    %1858 = vmatpush1.msra.mxu0 0.0
    %1859 = vmatprep.subr.mxu0 0.0
    %1860 = vmatpush1.msra.mxu0 0.0
    %1861 = vmatprep.subr.mxu0 0.0
    %1862 = vmatpush1.msra.mxu0 0.0
    %1863 = vmatprep.subr.mxu0 0.0
    %1864 = vmatpush1.msra.mxu0 0.0
    %1865 = vmatprep.subr.mxu0 0.0
    %1866 = vmatpush1.msra.mxu0 0.0
    %1867 = vmatprep.subr.mxu0 0.0
    %1868 = vmatpush1.msra.mxu0 0.0
    %1869 = vmatprep.mubr.f32.mxu0 0.0
    %1870 = vmatmul.mubr.f32.gmra.mrb[0].mxu0 %v1803
    %v1871 = vpop.f32.mrb[0].mxu0
    %v1872 = vadd.f32 0.0, %v1871
    %v1873 = vpop.f32.mrb[0].mxu0
    %1874 = vdwg.mxu0
    %v1875 = vadd.f32 %v1802, %v1872
    %v1876 = vmul.f32 %v1875, %v66
    %v1877 = vtanh.pop %v1876
    %v1878 = vmul.f32 %v1877, %v66
    %v1879 = vadd.f32 %v1878, %v67
    %v1880 = vmul.f32 %v1879, %v1790
    %1882 = vrot.lane.b32.xlu0 %v1879, 64
    %v1883 = vpop.permute.xlu0 %1882
    %v1885 = vmul.f32 %v1879, %v1883
    %1887 = vrot.lane.b32.xlu0 %v1885, 32
    %v1888 = vpop.permute.xlu0 %1887
    %v1890 = vadd.f32 %v1880, %v1888
    %v1891 = vtanh.pop %v1890
    %1893 = vrot.lane.b32.xlu0 %v1891, 64
    %v1894 = vpop.permute.xlu0 %1893
    %v1896 = vmul.f32 %v1879, %v1894
    %1898 = vrot.lane.b32.xlu0 %v1896, 32
    %v1899 = vpop.permute.xlu0 %1898
    %1901 = vst.msk [vmem:[%s940] sm:$0xff] %vm91, %v1899
    %v1902 = vld [vmem:[%s942] sm:$0xff]
    %v1903 = vsel %vm91, %v1899, 0
    %1905 = vmatprep.subr.mxu0 0.0
    %1906 = vmatpush1.msra.mxu0 %v1048
    %1907 = vmatprep.subr.mxu0 0.0
    %1908 = vmatpush1.msra.mxu0 %v1049
    %1909 = vmatprep.subr.mxu0 0.0
    %1910 = vmatpush1.msra.mxu0 %v1050
    %1911 = vmatprep.subr.mxu0 0.0
    %1912 = vmatpush1.msra.mxu0 %v1051
    %1913 = vmatprep.subr.mxu0 0.0
    %1914 = vmatpush1.msra.mxu0 0.0
    %1915 = vmatprep.subr.mxu0 0.0
    %1916 = vmatpush1.msra.mxu0 0.0
    %1917 = vmatprep.subr.mxu0 0.0
    %1918 = vmatpush1.msra.mxu0 0.0
    %1919 = vmatprep.subr.mxu0 0.0
    %1920 = vmatpush1.msra.mxu0 0.0
    %1921 = vmatprep.subr.mxu0 0.0
    %1922 = vmatpush1.msra.mxu0 0.0
    %1923 = vmatprep.subr.mxu0 0.0
    %1924 = vmatpush1.msra.mxu0 0.0
    %1925 = vmatprep.subr.mxu0 0.0
    %1926 = vmatpush1.msra.mxu0 0.0
    %1927 = vmatprep.subr.mxu0 0.0
    %1928 = vmatpush1.msra.mxu0 0.0
    %1929 = vmatprep.subr.mxu0 0.0
    %1930 = vmatpush1.msra.mxu0 0.0
    %1931 = vmatprep.subr.mxu0 0.0
    %1932 = vmatpush1.msra.mxu0 0.0
    %1933 = vmatprep.subr.mxu0 0.0
    %1934 = vmatpush1.msra.mxu0 0.0
    %1935 = vmatprep.subr.mxu0 0.0
    %1936 = vmatpush1.msra.mxu0 0.0
    %1937 = vmatprep.subr.mxu0 0.0
    %1938 = vmatpush1.msra.mxu0 0.0
    %1939 = vmatprep.subr.mxu0 0.0
    %1940 = vmatpush1.msra.mxu0 0.0
    %1941 = vmatprep.subr.mxu0 0.0
    %1942 = vmatpush1.msra.mxu0 0.0
    %1943 = vmatprep.subr.mxu0 0.0
    %1944 = vmatpush1.msra.mxu0 0.0
    %1945 = vmatprep.subr.mxu0 0.0
    %1946 = vmatpush1.msra.mxu0 0.0
    %1947 = vmatprep.subr.mxu0 0.0
    %1948 = vmatpush1.msra.mxu0 0.0
    %1949 = vmatprep.subr.mxu0 0.0
    %1950 = vmatpush1.msra.mxu0 0.0
    %1951 = vmatprep.subr.mxu0 0.0
    %1952 = vmatpush1.msra.mxu0 0.0
    %1953 = vmatprep.subr.mxu0 0.0
    %1954 = vmatpush1.msra.mxu0 0.0
    %1955 = vmatprep.subr.mxu0 0.0
    %1956 = vmatpush1.msra.mxu0 0.0
    %1957 = vmatprep.subr.mxu0 0.0
    %1958 = vmatpush1.msra.mxu0 0.0
    %1959 = vmatprep.subr.mxu0 0.0
    %1960 = vmatpush1.msra.mxu0 0.0
    %1961 = vmatprep.subr.mxu0 0.0
    %1962 = vmatpush1.msra.mxu0 0.0
    %1963 = vmatprep.subr.mxu0 0.0
    %1964 = vmatpush1.msra.mxu0 0.0
    %1965 = vmatprep.subr.mxu0 0.0
    %1966 = vmatpush1.msra.mxu0 0.0
    %1967 = vmatprep.subr.mxu0 0.0
    %1968 = vmatpush1.msra.mxu0 0.0
    %1969 = vmatprep.mubr.f32.mxu0 0.0
    %1970 = vmatmul.mubr.f32.gmra.mrb[0].mxu0 %v1903
    %v1971 = vpop.f32.mrb[0].mxu0
    %v1972 = vadd.f32 0.0, %v1971
    %v1973 = vpop.f32.mrb[0].mxu0
    %1974 = vdwg.mxu0
    %v1975 = vadd.f32 %v1902, %v1972
    %v1976 = vmul.f32 %v1975, %v66
    %v1977 = vtanh.pop %v1976
    %v1978 = vmul.f32 %v1977, %v66
    %v1979 = vadd.f32 %v1978, %v67
    %v1980 = vmul.f32 %v1979, %v1890
    %1982 = vrot.lane.b32.xlu0 %v1979, 64
    %v1983 = vpop.permute.xlu0 %1982
    %v1985 = vmul.f32 %v1979, %v1983
    %1987 = vrot.lane.b32.xlu0 %v1985, 32
    %v1988 = vpop.permute.xlu0 %1987
    %v1990 = vadd.f32 %v1980, %v1988
    %v1991 = vtanh.pop %v1990
    %1993 = vrot.lane.b32.xlu0 %v1991, 64
    %v1994 = vpop.permute.xlu0 %1993
    %v1996 = vmul.f32 %v1979, %v1994
    %1998 = vrot.lane.b32.xlu0 %v1996, 32
    %v1999 = vpop.permute.xlu0 %1998
    %2001 = vst.msk [vmem:[%s1042] sm:$0xff] %vm91, %v1999
    %v2002 = vld [vmem:[#allocation7] sm:$0xff]
    %v2003 = vld [vmem:[#allocation7 + $0x8] sm:$0xff]
    %v2004 = vld [vmem:[#allocation7 + $0x10] sm:$0xff]
    %v2005 = vld [vmem:[#allocation7 + $0x18] sm:$0xff]
    %v2006 = vld [vmem:[%s8] sm:$0x1]
    %v2007 = vld [vmem:[#allocation3] sm:$0xff]
    %v2008 = vld [vmem:[#allocation3 + $0x8] sm:$0xff]
    %v2009 = vld [vmem:[#allocation3 + $0x10] sm:$0xff]
    %v2010 = vld [vmem:[#allocation3 + $0x18] sm:$0xff]
    %v2011 = vld [vmem:[#allocation3 + $0x20] sm:$0xff]
    %v2012 = vld [vmem:[#allocation3 + $0x28] sm:$0xff]
    %v2013 = vld [vmem:[#allocation3 + $0x30] sm:$0xff]
    %v2014 = vld [vmem:[#allocation3 + $0x38] sm:$0xff]
    %v2016 = vlaneseq
    %v2017 = vshrl.u32 %v2016, 7
    %v2018 = vsub.s32 0, %v2017
    %v2019 = vrot.slane %v2006, %v2018
    %v2022 = vsel %vm91, %v2007, 0
    %v2025 = vsel %vm91, %v2008, 0
    %v2028 = vsel %vm91, %v2009, 0
    %v2031 = vsel %vm91, %v2010, 0
    %v2034 = vsel %vm91, %v2011, 0
    %v2037 = vsel %vm91, %v2012, 0
    %v2040 = vsel %vm91, %v2013, 0
    %v2043 = vsel %vm91, %v2014, 0
    %2045 = vmatprep.subr.mxu0 0.0
    %2046 = vmatpush1.msra.mxu0 %v2002
    %2047 = vmatprep.subr.mxu0 0.0
    %2048 = vmatpush1.msra.mxu0 %v2003
    %2049 = vmatprep.subr.mxu0 0.0
    %2050 = vmatpush1.msra.mxu0 %v2004
    %2051 = vmatprep.subr.mxu0 0.0
    %2052 = vmatpush1.msra.mxu0 %v2005
    %2053 = vmatprep.subr.mxu0 0.0
    %2054 = vmatpush1.msra.mxu0 0.0
    %2055 = vmatprep.subr.mxu0 0.0
    %2056 = vmatpush1.msra.mxu0 0.0
    %2057 = vmatprep.subr.mxu0 0.0
    %2058 = vmatpush1.msra.mxu0 0.0
    %2059 = vmatprep.subr.mxu0 0.0
    %2060 = vmatpush1.msra.mxu0 0.0
    %2061 = vmatprep.subr.mxu0 0.0
    %2062 = vmatpush1.msra.mxu0 0.0
    %2063 = vmatprep.subr.mxu0 0.0
    %2064 = vmatpush1.msra.mxu0 0.0
    %2065 = vmatprep.subr.mxu0 0.0
    %2066 = vmatpush1.msra.mxu0 0.0
    %2067 = vmatprep.subr.mxu0 0.0
    %2068 = vmatpush1.msra.mxu0 0.0
    %2069 = vmatprep.subr.mxu0 0.0
    %2070 = vmatpush1.msra.mxu0 0.0
    %2071 = vmatprep.subr.mxu0 0.0
    %2072 = vmatpush1.msra.mxu0 0.0
    %2073 = vmatprep.subr.mxu0 0.0
    %2074 = vmatpush1.msra.mxu0 0.0
    %2075 = vmatprep.subr.mxu0 0.0
    %2076 = vmatpush1.msra.mxu0 0.0
    %2077 = vmatprep.subr.mxu0 0.0
    %2078 = vmatpush1.msra.mxu0 0.0
    %2079 = vmatprep.subr.mxu0 0.0
    %2080 = vmatpush1.msra.mxu0 0.0
    %2081 = vmatprep.subr.mxu0 0.0
    %2082 = vmatpush1.msra.mxu0 0.0
    %2083 = vmatprep.subr.mxu0 0.0
    %2084 = vmatpush1.msra.mxu0 0.0
    %2085 = vmatprep.subr.mxu0 0.0
    %2086 = vmatpush1.msra.mxu0 0.0
    %2087 = vmatprep.subr.mxu0 0.0
    %2088 = vmatpush1.msra.mxu0 0.0
    %2089 = vmatprep.subr.mxu0 0.0
    %2090 = vmatpush1.msra.mxu0 0.0
    %2091 = vmatprep.subr.mxu0 0.0
    %2092 = vmatpush1.msra.mxu0 0.0
    %2093 = vmatprep.subr.mxu0 0.0
    %2094 = vmatpush1.msra.mxu0 0.0
    %2095 = vmatprep.subr.mxu0 0.0
    %2096 = vmatpush1.msra.mxu0 0.0
    %2097 = vmatprep.subr.mxu0 0.0
    %2098 = vmatpush1.msra.mxu0 0.0
    %2099 = vmatprep.subr.mxu0 0.0
    %2100 = vmatpush1.msra.mxu0 0.0
    %2101 = vmatprep.subr.mxu0 0.0
    %2102 = vmatpush1.msra.mxu0 0.0
    %2103 = vmatprep.subr.mxu0 0.0
    %2104 = vmatpush1.msra.mxu0 0.0
    %2105 = vmatprep.subr.mxu0 0.0
    %2106 = vmatpush1.msra.mxu0 0.0
    %2107 = vmatprep.subr.mxu0 0.0
    %2108 = vmatpush1.msra.mxu0 0.0
    %2109 = vmatprep.mubr.f32.mxu0 0.0
    %2110 = vmatmul.mubr.f32.gmra.mrb[0].mxu0 %v2022
    %v2111 = vpop.f32.mrb[0].mxu0
    %v2112 = vadd.f32 %v2019, %v2111
    %v2113 = vpop.f32.mrb[0].mxu0
    %2114 = vmatprep.mubr.f32.mxu0 0.0
    %2115 = vmatmul.mubr.f32.gmra.mrb[0].mxu0 %v2025
    %v2116 = vpop.f32.mrb[0].mxu0
    %v2117 = vadd.f32 %v2019, %v2116
    %v2118 = vpop.f32.mrb[0].mxu0
    %2119 = vmatprep.mubr.f32.mxu0 0.0
    %2120 = vmatmul.mubr.f32.gmra.mrb[0].mxu0 %v2028
    %v2121 = vpop.f32.mrb[0].mxu0
    %v2122 = vadd.f32 %v2019, %v2121
    %v2123 = vpop.f32.mrb[0].mxu0
    %2124 = vmatprep.mubr.f32.mxu0 0.0
    %2125 = vmatmul.mubr.f32.gmra.mrb[0].mxu0 %v2031
    %v2126 = vpop.f32.mrb[0].mxu0
    %v2127 = vadd.f32 %v2019, %v2126
    %v2128 = vpop.f32.mrb[0].mxu0
    %2129 = vmatprep.mubr.f32.mxu0 0.0
    %2130 = vmatmul.mubr.f32.gmra.mrb[0].mxu0 %v2034
    %v2131 = vpop.f32.mrb[0].mxu0
    %v2132 = vadd.f32 %v2019, %v2131
    %v2133 = vpop.f32.mrb[0].mxu0
    %2134 = vmatprep.mubr.f32.mxu0 0.0
    %2135 = vmatmul.mubr.f32.gmra.mrb[0].mxu0 %v2037
    %v2136 = vpop.f32.mrb[0].mxu0
    %v2137 = vadd.f32 %v2019, %v2136
    %v2138 = vpop.f32.mrb[0].mxu0
    %2139 = vmatprep.mubr.f32.mxu0 0.0
    %2140 = vmatmul.mubr.f32.gmra.mrb[0].mxu0 %v2040
    %v2141 = vpop.f32.mrb[0].mxu0
    %v2142 = vadd.f32 %v2019, %v2141
    %v2143 = vpop.f32.mrb[0].mxu0
    %2144 = vmatprep.mubr.f32.mxu0 0.0
    %2145 = vmatmul.mubr.f32.gmra.mrb[0].mxu0 %v2043
    %v2146 = vpop.f32.mrb[0].mxu0
    %v2147 = vadd.f32 %v2019, %v2146
    %v2148 = vpop.f32.mrb[0].mxu0
    %2149 = vdwg.mxu0
    %2150 = vst [vmem:[#allocation9] sm:$0xff] %v2112
    %2151 = vst [vmem:[#allocation9 + $0x8] sm:$0xff] %v2117
    %2152 = vst [vmem:[#allocation9 + $0x10] sm:$0xff] %v2122
    %2153 = vst [vmem:[#allocation9 + $0x18] sm:$0xff] %v2127
    %2154 = vst [vmem:[#allocation9 + $0x20] sm:$0xff] %v2132
    %2155 = vst [vmem:[#allocation9 + $0x28] sm:$0xff] %v2137
    %2156 = vst [vmem:[#allocation9 + $0x30] sm:$0xff] %v2142
    %2157 = vst [vmem:[#allocation9 + $0x38] sm:$0xff] %v2147
    // Predicated region
    $region46: #{tpu_custom_call.1} parent=1 // pred_check
      _
    $region47: #{tpu_custom_call.1} parent=1 // pred_check_branch
      %2159 = sbr.rel (0) target = $region49
    $region48: #{tpu_custom_call.1} parent=1 // pred_region
      %s2161 = ssub.s32 1024, 1024
      %2162 = vsyncadd [#allocation6], %s2161
      %s2163 = sshll.u32 [#allocation9], 4
      %s2164 = int_to_ptr.vmem [resolvable:$true] %s2163
      %2169 = dma.vmem_to_hbm [thread:$0]  %s2164, 1024, %s9, [#allocation6], 128, 128, 8
    $region49: #{tpu_custom_call.1} parent=1 // pred_fallthru
      _
    // Predicated region
    $region50: #{tpu_custom_call.1} parent=1 // pred_check
      _
    $region51: #{tpu_custom_call.1} parent=1 // pred_check_branch
      %2171 = sbr.rel (0) target = $region53
    $region52: #{tpu_custom_call.1} parent=1 // pred_region
      %2172 = dma.done [#allocation6], 1024
    $region53: #{tpu_custom_call.1} parent=1 // pred_fallthru
      _
    %2173 = vsyncpa [#allocation5], 1
    %2174 = vsyncpa [#allocation8], 1
    %2175 = vsyncpa [#allocation6], 1

</llo_original>
